<compile_context>
chip_gen: v5e
topology: v5e:2x2
jax: 0.10.0
libtpu: 0.0.40
codegen_flags: <defaults>
</compile_context>

<pallas_src>
import numpy as np
import jax
import jax.numpy as jnp
from jax.experimental import pallas as pl
from jax.experimental.pallas import tpu as pltpu

# grid_scale = (0, 1) -> r_correction = max - min = 1.0 (module __init__)
GRID_SCALE = (0.0, 1.0)
VOXEL_SIZE = 0.5
R_CORRECTION = max(GRID_SCALE) - min(GRID_SCALE)

LANE = 128
MAX_TILE_N = 512      # kernel 1 node tile (parallel axis)
MAX_TILE_E = 512      # kernel 1 edge tile (reduction axis)
MAX_TILE_NP = 256     # kernel 2 node tile (reduction axis)
MAX_TILE_K = 64       # kernel 2 cluster tile (parallel axis); see header note
VMEM_LIMIT = 32 * 1024 * 1024
AGG_DTYPE = jnp.bfloat16   # dtype of the dominant S @ proj MXU matmul


def _round_up(v, m):
    return ((v + m - 1) // m) * m


def _choose_tile(size, max_tile, align, want_tiles=1):
    """Largest power-of-two multiple of `align` (<= max_tile) such that the
    padded array still has >= want_tiles tiles (v7x megacore) and the tile
    does not exceed the align-padded size."""
    size = max(int(size), 1)
    limit = _round_up(size, align)
    t = align
    while (t * 2 <= max_tile and t * 2 <= limit
           and _round_up(size, t * 2) // (t * 2) >= want_tiles):
        t *= 2
    return t


def _pad2(a, rows, cols=None):
    cols = a.shape[1] if cols is None else cols
    out = np.zeros((rows, cols), a.dtype)
    out[:a.shape[0], :a.shape[1]] = a
    return out


# ----------------------------------------------------------------------------
# Kernel 1: DPOConv (project messages -> sum-aggregate -> mean -> Linear tail)
#           fused with ReLU.  grid = (N tiles [parallel], E tiles [arbitrary]).
# ----------------------------------------------------------------------------
def _dpoconv_relu_kernel(msg_ref, x_ref, s_ref, inv_deg_ref,
                         w123_ref, w4_ref, b_ref, o_ref, acc_ref):
    k = pl.program_id(1)

    @pl.when(k == 0)
    def _():
        acc_ref[...] = jnp.zeros_like(acc_ref)

    # Single fused projection of the (host-precomputed) per-edge messages.
    proj = jnp.dot(msg_ref[...], w123_ref[...],
                   preferred_element_type=jnp.float32)          # (TE, C_pad)

    # Dominant matmul at bf16 MXU rate: S is an exact 0/1 bf16 matrix, proj is
    # rounded once to bf16; accumulation stays f32 in VMEM scratch.
    acc_ref[...] += jnp.dot(s_ref[...], proj.astype(AGG_DTYPE),
                            preferred_element_type=jnp.float32)

    @pl.when(k == pl.num_programs(1) - 1)
    def _():
        out = (acc_ref[...] * inv_deg_ref[...]      # mean aggregation (f32 VPU)
               + jnp.dot(x_ref[...], w4_ref[...],
                         preferred_element_type=jnp.float32)
               + b_ref[...])
        o_ref[...] = jnp.maximum(out, 0.0)          # ReLU


def dpoconv_relu_pallas(msg, x, s01, inv_deg, w123, w4, b, tile_n, tile_e):
    n_pad, c_in = x.shape
    e_pad, c3 = msg.shape
    c_pad = w123.shape[1]
    grid = (n_pad // tile_n, e_pad // tile_e)

    e_map = lambda i, k: (k, 0)
    n_map = lambda i, k: (i, 0)
    w_map = lambda i, k: (0, 0)

    grid_spec = pltpu.PrefetchScalarGridSpec(
        num_scalar_prefetch=0, grid=grid,
        in_specs=[
            pl.BlockSpec((tile_e, c3), e_map),                     # msg (f32)
            pl.BlockSpec((tile_n, c_in), n_map),                   # x
            # NOTE: if profiling shows this DMA exposed, add
            # pipeline_mode=pl.Buffered(3) here.
            pl.BlockSpec((tile_n, tile_e), lambda i, k: (i, k)),   # S (bf16)
            pl.BlockSpec((tile_n, 1), n_map),                      # 1/deg
            pl.BlockSpec((c3, c_pad), w_map),                      # w123
            pl.BlockSpec((c_in, c_pad), w_map),                    # w4
            pl.BlockSpec((1, c_pad), w_map),                       # bias
        ],
        out_specs=pl.BlockSpec((tile_n, c_pad), n_map),
        scratch_shapes=[pltpu.VMEM((tile_n, c_pad), jnp.float32)])

    return pl.pallas_call(
        _dpoconv_relu_kernel,
        out_shape=jax.ShapeDtypeStruct((n_pad, c_pad), jnp.float32),
        grid_spec=grid_spec,
        compiler_params=pltpu.CompilerParams(
            dimension_semantics=("parallel", "arbitrary"),
            vmem_limit_bytes=VMEM_LIMIT),
    )(msg, x, s01, inv_deg, w123, w4, b)


# ----------------------------------------------------------------------------
# Kernel 2: max_pool — per-cluster running max of features, per-cluster mean
#           of positions.  grid = (K tiles [parallel], N tiles [arbitrary]).
# ----------------------------------------------------------------------------
def _make_max_pool_kernel(pool_chunk):
    def _max_pool_kernel(x_ref, pos_ref, mask_ref, invc_ref, xo_ref, po_ref,
                         maxacc_ref, posacc_ref):
        nj = pl.program_id(1)

        @pl.when(nj == 0)
        def _():
            maxacc_ref[...] = jnp.full_like(maxacc_ref, -jnp.inf)
            posacc_ref[...] = jnp.zeros_like(posacc_ref)

        m = mask_ref[...].astype(jnp.float32)        # (TK, TN) 0/1 (bf16 exact)
        neg = jnp.float32(-jnp.inf)
        tn = m.shape[1]

        # Running max over node sub-chunks; the (TK, chunk, C) select temp is
        # bounded (pool_chunk shrinks as TK grows) so no O(K*N*C) broadcast is
        # ever materialized and live temps stay within a few tens of vregs.
        acc = maxacc_ref[...]
        for c0 in range(0, tn, pool_chunk):
            mc = m[:, c0:c0 + pool_chunk]                            # (TK, PC)
            xc = x_ref[c0:c0 + pool_chunk, :]                        # (PC, C)
            masked = jnp.where(mc[:, :, None] > 0.5, xc[None, :, :], neg)
            acc = jnp.maximum(acc, jnp.max(masked, axis=1))
        maxacc_ref[...] = acc

        # Cluster position sums as a narrow (TK, TN) @ (TN, 8) matmul
        # (8 pos lanes instead of 128); divided by counts at finalize.
        posacc_ref[...] += jnp.dot(m, pos_ref[...],
                                   preferred_element_type=jnp.float32)

        @pl.when(nj == pl.num_programs(1) - 1)
        def _():
            xo_ref[...] = maxacc_ref[...]
            po_ref[...] = posacc_ref[...] * invc_ref[...]

    return _max_pool_kernel


def max_pool_pallas(x_conv, pos8, mask, inv_cnt, tile_k, tile_np, pool_chunk):
    n_pad, c_pad = x_conv.shape
    k_pad = mask.shape[0]
    pos_pad = pos8.shape[1]
    grid = (k_pad // tile_k, n_pad // tile_np)

    k_map = lambda ki, nj: (ki, 0)
    n_map = lambda ki, nj: (nj, 0)

    grid_spec = pltpu.PrefetchScalarGridSpec(
        num_scalar_prefetch=0, grid=grid,
        in_specs=[
            pl.BlockSpec((tile_np, c_pad), n_map),                    # x_conv
            pl.BlockSpec((tile_np, pos_pad), n_map),                  # pos (8)
            pl.BlockSpec((tile_k, tile_np), lambda ki, nj: (ki, nj)),  # mask bf16
            pl.BlockSpec((tile_k, 1), k_map),                         # 1/count
        ],
        out_specs=[
            pl.BlockSpec((tile_k, c_pad), k_map),
            pl.BlockSpec((tile_k, pos_pad), k_map),
        ],
        scratch_shapes=[pltpu.VMEM((tile_k, c_pad), jnp.float32),
                        pltpu.VMEM((tile_k, pos_pad), jnp.float32)])

    return pl.pallas_call(
        _make_max_pool_kernel(pool_chunk),
        out_shape=(jax.ShapeDtypeStruct((k_pad, c_pad), jnp.float32),
                   jax.ShapeDtypeStruct((k_pad, pos_pad), jnp.float32)),
        grid_spec=grid_spec,
        compiler_params=pltpu.CompilerParams(
            dimension_semantics=("parallel", "arbitrary"),
            vmem_limit_bytes=VMEM_LIMIT),
    )(x_conv, pos8, mask, inv_cnt)


# ----------------------------------------------------------------------------
# Host glue
# ----------------------------------------------------------------------------
def voxel_grid_cluster(pos, batch, size, start, end):
    # torch_geometric.nn.voxel_grid: append batch as an extra grid dim of size 1.
    pos_ext = np.concatenate([pos, batch[:, None].astype(pos.dtype)], axis=1)
    size_a = np.array([size, size, 1.0])
    start_a = np.array([start, start, 0.0])
    c = np.floor((pos_ext - start_a) / size_a).astype(np.int64)
    end_a = np.array([end, end, float(batch.max())])
    num_vox = np.floor((end_a - start_a) / size_a).astype(np.int64) + 1
    cluster = np.zeros(pos.shape[0], dtype=np.int64)
    k = 1
    for d in range(3):
        cluster += c[:, d] * k
        k *= int(num_vox[d])
    return cluster


def downsample_module_forward(x, edge_index, pos, batch, weight, bias,
                              voxel_size=VOXEL_SIZE, grid_scale=GRID_SCALE):
    """Forward of DownsampleModule.  Returns (data_dict, orig_pos, orig_batch)."""
    x_np = np.asarray(x, np.float32)
    pos_np = np.asarray(pos, np.float32)
    ei = np.asarray(edge_index, np.int64)
    batch_np = np.asarray(batch, np.int64)
    n, c_in = x_np.shape
    c_out = np.asarray(weight).shape[0]
    src, dst = ei[0], ei[1]                 # messages flow src (j) -> dst (i)
    e = src.shape[0]

    # adaptive tiles: as large as useful, >= 2 parallel tiles where possible
    tile_n = _choose_tile(n, MAX_TILE_N, LANE, want_tiles=2)
    tile_e = _choose_tile(e, MAX_TILE_E, LANE, want_tiles=1)
    tile_np = _choose_tile(n, MAX_TILE_NP, LANE, want_tiles=1)
    n_pad = _round_up(n, max(tile_n, tile_np))
    e_pad = _round_up(max(e, 1), tile_e)
    c_pad = _round_up(max(c_out, 1), LANE)

    # per-edge message matrix precomputed on the host (gather + geometric
    # coefficients): msg = [v_diff*dx, v_diff*dy, v_j]  (E, 3*c_in)
    v_i, v_j = x_np[dst], x_np[src]
    diff = pos_np[dst] - pos_np[src]
    r2 = (diff * diff).sum(axis=1, keepdims=True)
    coef = (R_CORRECTION / (r2 + 0.01)).astype(np.float32)
    v_diff = v_i - v_j
    msg = np.concatenate([v_diff * (diff[:, 0:1] * coef),
                          v_diff * (diff[:, 1:2] * coef),
                          v_j], axis=1).astype(np.float32)
    msg = _pad2(msg, e_pad)

    # 0/1 membership matrix (bf16 on device, exact) + reciprocal degree (f32).
    # TODO(synk): replace dense (N,E)/(K,N) matrices with sorted-segment
    # kernels (scalar-prefetch offsets) before scaling to production graphs.
    deg = np.zeros(n_pad, np.float32)
    np.add.at(deg, dst, 1.0)
    s01 = np.zeros((n_pad, e_pad), np.float32)
    s01[dst, np.arange(e)] = 1.0
    inv_deg = (1.0 / np.maximum(deg, 1.0))[:, None].astype(np.float32)

    # nn.Linear(4C, c_out): y = in @ W.T + b; W.T split into a fused 3C block
    # (message path) and a C block (skip path), padded to lane-dense c_pad.
    wt = np.zeros((4 * c_in, c_pad), np.float32)
    wt[:, :c_out] = np.asarray(weight, np.float32).T
    w123, w4 = wt[:3 * c_in], wt[3 * c_in:]
    b2 = np.zeros((1, c_pad), np.float32)
    b2[0, :c_out] = np.asarray(bias, np.float32)

    x_pad = _pad2(x_np, n_pad)

    x_conv_pad = dpoconv_relu_pallas(
        jnp.asarray(msg), jnp.asarray(x_pad),
        jnp.asarray(s01).astype(jnp.bfloat16), jnp.asarray(inv_deg),
        jnp.asarray(w123), jnp.asarray(w4), jnp.asarray(b2),
        tile_n, tile_e)                      # (n_pad, c_pad), ReLU'd, f32

    # voxel_grid + consecutive relabel (data-dependent cluster count -> host)
    cluster = voxel_grid_cluster(pos_np, batch_np, voxel_size,
                                 grid_scale[0], grid_scale[1])
    _, inv = np.unique(cluster, return_inverse=True)
    k = int(inv.max()) + 1
    tile_k = _choose_tile(k, MAX_TILE_K, 8, want_tiles=2)
    pool_chunk = int(max(4, min(16, 128 // tile_k)))
    k_pad = _round_up(k, tile_k)

    # mask columns for padded nodes stay zero -> padded x_conv rows (==ReLU(b))
    # can never win the max.  Counts clamp keeps padded clusters finite.
    mask = np.zeros((k_pad, n_pad), np.float32)
    mask[inv, np.arange(n)] = 1.0
    counts = mask.sum(axis=1, keepdims=True)
    inv_cnt = (1.0 / np.maximum(counts, 1.0)).astype(np.float32)
    pos8 = np.zeros((n_pad, 8), np.float32)        # 8 pos lanes, not 128
    pos8[:n, :pos_np.shape[1]] = pos_np

    x_pool_p, pos_pool_p = max_pool_pallas(
        x_conv_pad, jnp.asarray(pos8),
        jnp.asarray(mask).astype(jnp.bfloat16), jnp.asarray(inv_cnt),
        tile_k, tile_np, pool_chunk)

    x_pool = x_pool_p[:k, :c_out]
    pos_pool = pos_pool_p[:k, :pos_np.shape[1]]

    # pooled batch (one representative per cluster) and coarsened edge_index
    rep = np.zeros(k, dtype=np.int64)
    rep[inv] = np.arange(n)
    batch_pool = batch_np[rep]
    ce = inv[ei]
    keep = ce[0] != ce[1]
    ce = ce[:, keep]
    if ce.size:
        ce = np.unique(ce.T, axis=0).T          # coalesce (remove duplicates)
    # TODO(synk): coarse edge_attr coalescing skipped (edge_attr is None here).

    data_out = {"x": x_pool, "pos": pos_pool, "batch": batch_pool,
                "edge_index": ce, "edge_attr": None}
    return data_out, pos_np, batch_np


# ----------------------------------------------------------------------------
# Pure-numpy reference for validation
# ----------------------------------------------------------------------------
def numpy_reference(x, edge_index, pos, batch, weight, bias,
                    voxel_size=VOXEL_SIZE, grid_scale=GRID_SCALE):
    x = np.asarray(x, np.float64)
    pos = np.asarray(pos, np.float64)
    ei = np.asarray(edge_index, np.int64)
    batch = np.asarray(batch, np.int64)
    src, dst = ei[0], ei[1]
    n = x.shape[0]
    r_corr = max(grid_scale) - min(grid_scale)

    v_i, v_j = x[dst], x[src]
    diff = pos[dst] - pos[src]
    r2 = (diff ** 2).sum(axis=1)
    coef = r_corr / (r2 + 0.01)
    dx = (diff[:, 0] * coef)[:, None]
    dy = (diff[:, 1] * coef)[:, None]
    v_diff = v_i - v_j
    msg = np.concatenate([v_diff * dx, v_diff * dy, v_j], axis=1)

    agg = np.zeros((n, msg.shape[1]))
    cnt = np.zeros(n)
    np.add.at(agg, dst, msg)
    np.add.at(cnt, dst, 1.0)
    agg = agg / np.maximum(cnt, 1.0)[:, None]

    feat = np.concatenate([agg, x], axis=1)
    conv = np.maximum(feat @ np.asarray(weight, np.float64).T
                      + np.asarray(bias, np.float64), 0.0)

    cluster = voxel_grid_cluster(np.asarray(pos, np.float32), batch,
                                 voxel_size, grid_scale[0], grid_scale[1])
    _, inv = np.unique(cluster, return_inverse=True)
    k = int(inv.max()) + 1
    xp = np.full((k, conv.shape[1]), -np.inf)
    np.maximum.at(xp, inv, conv)
    pp = np.zeros((k, pos.shape[1]))
    c = np.zeros(k)
    np.add.at(pp, inv, pos)
    np.add.at(c, inv, 1.0)
    pp = pp / c[:, None]
    return xp, pp


# ----------------------------------------------------------------------------
if __name__ == "__main__":
    N, C_IN, C_OUT, E = 256, 4, 8, 512

    key = jax.random.PRNGKey(0)
    ks = jax.random.split(key, 8)
    x = jax.random.normal(ks[0], (N, C_IN), dtype=jnp.float32)
    pos = jax.random.uniform(ks[1], (N, 2), dtype=jnp.float32)
    batch = np.concatenate([np.zeros(N // 2, np.int64), np.ones(N // 2, np.int64)])

    # random edges kept within each graph of the batch
    src0 = jax.random.randint(ks[2], (E // 2,), 0, N // 2)
    dst0 = jax.random.randint(ks[3], (E // 2,), 0, N // 2)
    src1 = jax.random.randint(ks[4], (E // 2,), N // 2, N)
    dst1 = jax.random.randint(ks[5], (E // 2,), N // 2, N)
    edge_index = np.stack([np.concatenate([np.asarray(src0), np.asarray(src1)]),
                           np.concatenate([np.asarray(dst0), np.asarray(dst1)])])

    # deterministic Linear(4*C_IN, C_OUT) parameters
    weight = 0.1 * jax.random.normal(ks[6], (C_OUT, 4 * C_IN), dtype=jnp.float32)
    bias = 0.1 * jax.random.normal(ks[7], (C_OUT,), dtype=jnp.float32)

    data_out, orig_pos, orig_batch = downsample_module_forward(
        x, edge_index, pos, batch, weight, bias)
    x_pool = jax.block_until_ready(data_out["x"])
    pos_pool = jax.block_until_ready(data_out["pos"])

    ref_x_pool, ref_pos_pool = numpy_reference(x, edge_index, pos, batch,
                                               weight, bias)
    assert np.asarray(x_pool).shape == ref_x_pool.shape, "pooled feature shape"
    assert np.asarray(pos_pool).shape == ref_pos_pool.shape, "pooled pos shape"
    # Feature tolerance is sized for the single bf16 rounding of the projected
    # messages (review item: run the dominant S @ proj matmul in bf16 on the
    # MXU, f32 accumulate).  Any structural error is orders of magnitude larger.
    assert np.allclose(np.asarray(x_pool), ref_x_pool, rtol=2e-2, atol=2e-2), \
        "pooled feature mismatch"
    # Position path stays fully f32 -> tight tolerance.
    assert np.allclose(np.asarray(pos_pool), ref_pos_pool, rtol=2e-3, atol=1e-3), \
        "pooled position mismatch"

    print("KERNEL_OK")
</pallas_src>

<mosaic_0001>
module attributes {stable_mosaic.version = 11 : i64} {
  func.func @_dpoconv_relu_kernel(%arg0: i32, %arg1: i32, %arg2: memref<512x12xf32, #tpu.memory_space<vmem>>, %arg3: memref<128x4xf32, #tpu.memory_space<vmem>>, %arg4: memref<128x512xbf16, #tpu.memory_space<vmem>>, %arg5: memref<128x1xf32, #tpu.memory_space<vmem>>, %arg6: memref<12x128xf32, #tpu.memory_space<vmem>>, %arg7: memref<4x128xf32, #tpu.memory_space<vmem>>, %arg8: memref<1x128xf32, #tpu.memory_space<vmem>>, %arg9: memref<128x128xf32, #tpu.memory_space<vmem>>, %arg10: memref<128x128xf32, #tpu.memory_space<vmem>>) attributes {dimension_semantics = [#tpu.dimension_semantics<parallel>, #tpu.dimension_semantics<arbitrary>], iteration_bounds = array<i64: 2, 1>, scalar_prefetch = 0 : i64, scratch_operands = 1 : i64, tpu.core_type = #tpu.core_type<tc>, window_params = [{transform_indices = @transform_0, window_bounds = array<i64: 512, 12>}, {transform_indices = @transform_1, window_bounds = array<i64: 128, 4>}, {transform_indices = @transform_2, window_bounds = array<i64: 128, 512>}, {transform_indices = @transform_3, window_bounds = array<i64: 128, 1>}, {pipeline_mode = #tpu.pipeline_mode<synchronous>, transform_indices = @transform_4, window_bounds = array<i64: 12, 128>}, {pipeline_mode = #tpu.pipeline_mode<synchronous>, transform_indices = @transform_5, window_bounds = array<i64: 4, 128>}, {pipeline_mode = #tpu.pipeline_mode<synchronous>, transform_indices = @transform_6, window_bounds = array<i64: 1, 128>}, {transform_indices = @transform_7, window_bounds = array<i64: 128, 128>}]} {
    %c0_i32 = arith.constant 0 : i32
    %0 = arith.cmpi eq, %arg1, %c0_i32 : i32
    %1 = arith.extui %0 : i1 to i32
    %c0_i32_0 = arith.constant 0 : i32
    %2 = arith.cmpi ne, %1, %c0_i32_0 : i32
    scf.if %2 {
      %cst_13 = arith.constant 0.000000e+00 : f32
      %15 = vector.broadcast %cst_13 : f32 to vector<128x128xf32>
      %c0_14 = arith.constant 0 : index
      %c0_15 = arith.constant 0 : index
      %16 = vector.load %arg10[%c0_14, %c0_15] : memref<128x128xf32, #tpu.memory_space<vmem>>, vector<128x128xf32>
      tpu.vector_store %arg10[%c0_14, %c0_15], %15 {strides = array<i32>} : memref<128x128xf32, #tpu.memory_space<vmem>>, vector<128x128xf32>,
    } else {
    }
    %c0 = arith.constant 0 : index
    %c0_1 = arith.constant 0 : index
    %3 = vector.load %arg2[%c0, %c0_1] : memref<512x12xf32, #tpu.memory_space<vmem>>, vector<512x12xf32>
    %c0_2 = arith.constant 0 : index
    %c0_3 = arith.constant 0 : index
    %4 = vector.load %arg6[%c0_2, %c0_3] : memref<12x128xf32, #tpu.memory_space<vmem>>, vector<12x128xf32>
    %cst = arith.constant dense<0.000000e+00> : vector<512x128xf32>
    %5 = tpu.matmul %3, %4, %cst {dimension_numbers = #tpu.dot_dimension_numbers<[1], [0], [0], [1], [0, 0, 1, 1], [], []>} : vector<512x12xf32>, vector<12x128xf32>, vector<512x128xf32> -> vector<512x128xf32>
    %c0_4 = arith.constant 0 : index
    %c0_5 = arith.constant 0 : index
    %6 = vector.load %arg10[%c0_4, %c0_5] : memref<128x128xf32, #tpu.memory_space<vmem>>, vector<128x128xf32>
    %c0_6 = arith.constant 0 : index
    %c0_7 = arith.constant 0 : index
    %7 = vector.load %arg4[%c0_6, %c0_7] : memref<128x512xbf16, #tpu.memory_space<vmem>>, vector<128x512xbf16>
    %8 = arith.truncf %5 : vector<512x128xf32> to vector<512x128xbf16>
    %cst_8 = arith.constant dense<0.000000e+00> : vector<128x128xf32>
    %9 = tpu.matmul %7, %8, %cst_8 {dimension_numbers = #tpu.dot_dimension_numbers<[1], [0], [0], [1], [0, 0, 1, 1], [], []>} : vector<128x512xbf16>, vector<512x128xbf16>, vector<128x128xf32> -> vector<128x128xf32>
    %10 = arith.addf %6, %9 : vector<128x128xf32>
    %c0_9 = arith.constant 0 : index
    %c0_10 = arith.constant 0 : index
    %11 = vector.load %arg10[%c0_9, %c0_10] : memref<128x128xf32, #tpu.memory_space<vmem>>, vector<128x128xf32>
    tpu.vector_store %arg10[%c0_9, %c0_10], %10 {strides = array<i32>} : memref<128x128xf32, #tpu.memory_space<vmem>>, vector<128x128xf32>,
    %c0_i32_11 = arith.constant 0 : i32
    %12 = arith.cmpi eq, %arg1, %c0_i32_11 : i32
    %13 = arith.extui %12 : i1 to i32
    %c0_i32_12 = arith.constant 0 : i32
    %14 = arith.cmpi ne, %13, %c0_i32_12 : i32
    scf.if %14 {
      %c0_13 = arith.constant 0 : index
      %c0_14 = arith.constant 0 : index
      %15 = vector.load %arg10[%c0_13, %c0_14] : memref<128x128xf32, #tpu.memory_space<vmem>>, vector<128x128xf32>
      %c0_15 = arith.constant 0 : index
      %c0_16 = arith.constant 0 : index
      %16 = vector.load %arg5[%c0_15, %c0_16] : memref<128x1xf32, #tpu.memory_space<vmem>>, vector<128x1xf32>
      %17 = vector.broadcast %16 : vector<128x1xf32> to vector<128x128xf32>
      %18 = arith.mulf %15, %17 : vector<128x128xf32>
      %c0_17 = arith.constant 0 : index
      %c0_18 = arith.constant 0 : index
      %19 = vector.load %arg3[%c0_17, %c0_18] : memref<128x4xf32, #tpu.memory_space<vmem>>, vector<128x4xf32>
      %c0_19 = arith.constant 0 : index
      %c0_20 = arith.constant 0 : index
      %20 = vector.load %arg7[%c0_19, %c0_20] : memref<4x128xf32, #tpu.memory_space<vmem>>, vector<4x128xf32>
      %cst_21 = arith.constant dense<0.000000e+00> : vector<128x128xf32>
      %21 = tpu.matmul %19, %20, %cst_21 {dimension_numbers = #tpu.dot_dimension_numbers<[1], [0], [0], [1], [0, 0, 1, 1], [], []>} : vector<128x4xf32>, vector<4x128xf32>, vector<128x128xf32> -> vector<128x128xf32>
      %22 = arith.addf %18, %21 : vector<128x128xf32>
      %c0_22 = arith.constant 0 : index
      %c0_23 = arith.constant 0 : index
      %23 = vector.load %arg8[%c0_22, %c0_23] : memref<1x128xf32, #tpu.memory_space<vmem>>, vector<1x128xf32>
      %24 = vector.broadcast %23 : vector<1x128xf32> to vector<128x128xf32>
      %25 = arith.addf %22, %24 : vector<128x128xf32>
      %cst_24 = arith.constant 0.000000e+00 : f32
      %26 = vector.broadcast %cst_24 : f32 to vector<128x128xf32>
      %27 = arith.maximumf %25, %26 : vector<128x128xf32>
      %c0_25 = arith.constant 0 : index
      %c0_26 = arith.constant 0 : index
      %28 = vector.load %arg9[%c0_25, %c0_26] : memref<128x128xf32, #tpu.memory_space<vmem>>, vector<128x128xf32>
      tpu.vector_store %arg9[%c0_25, %c0_26], %27 {strides = array<i32>} : memref<128x128xf32, #tpu.memory_space<vmem>>, vector<128x128xf32>,
    } else {
    }
    return
  }
  func.func @transform_0(%arg0: i32, %arg1: i32) -> (i32, i32) {
    %c0_i32 = arith.constant 0 : i32
    %c0_i32_0 = arith.constant 0 : i32
    return %arg1, %c0_i32 : i32, i32
  }
  func.func @transform_1(%arg0: i32, %arg1: i32) -> (i32, i32) {
    %c0_i32 = arith.constant 0 : i32
    %c0_i32_0 = arith.constant 0 : i32
    return %arg0, %c0_i32 : i32, i32
  }
  func.func @transform_2(%arg0: i32, %arg1: i32) -> (i32, i32) {
    %c0_i32 = arith.constant 0 : i32
    return %arg0, %arg1 : i32, i32
  }
  func.func @transform_3(%arg0: i32, %arg1: i32) -> (i32, i32) {
    %c0_i32 = arith.constant 0 : i32
    %c0_i32_0 = arith.constant 0 : i32
    return %arg0, %c0_i32 : i32, i32
  }
  func.func @transform_4(%arg0: i32, %arg1: i32) -> (i32, i32) {
    %c0_i32 = arith.constant 0 : i32
    %c0_i32_0 = arith.constant 0 : i32
    %c0_i32_1 = arith.constant 0 : i32
    return %c0_i32, %c0_i32_0 : i32, i32
  }
  func.func @transform_5(%arg0: i32, %arg1: i32) -> (i32, i32) {
    %c0_i32 = arith.constant 0 : i32
    %c0_i32_0 = arith.constant 0 : i32
    %c0_i32_1 = arith.constant 0 : i32
    return %c0_i32, %c0_i32_0 : i32, i32
  }
  func.func @transform_6(%arg0: i32, %arg1: i32) -> (i32, i32) {
    %c0_i32 = arith.constant 0 : i32
    %c0_i32_0 = arith.constant 0 : i32
    %c0_i32_1 = arith.constant 0 : i32
    return %c0_i32, %c0_i32_0 : i32, i32
  }
  func.func @transform_7(%arg0: i32, %arg1: i32) -> (i32, i32) {
    %c0_i32 = arith.constant 0 : i32
    %c0_i32_0 = arith.constant 0 : i32
    return %arg0, %c0_i32 : i32, i32
  }
}

</mosaic_0001>

<llo_original>
// kernel: tpu_custom_call.1
$region0: #{tpu_custom_call.1}
  #allocation0 [shape = 'u32[]', space=smem, size = 0x4, offset = 0x4, fixed_abs, tag = 'smem constant byte address 0x4 - core index']
  #allocation1 [shape = 'u32[72,128]{1,0:T(1,128)}', space=vmem, size = 0x9000, scoped, tag = 'internal scratch']
  #allocation2 [shape = 'f32[128,128]{1,0:T(8,128)}', space=vmem, size = 0x10000, scoped, tag = 'scratch operand']
  %s0 = inlined_call_operand.vmem [shape: f32[512,12], index: 0, kind: input, shape index: {}]
  %s1 = inlined_call_operand.vmem [shape: f32[256,4], index: 1, kind: input, shape index: {}]
  %s2 = inlined_call_operand.vmem [shape: bf16[256,512], index: 2, kind: input, shape index: {}]
  %s3 = inlined_call_operand.vmem [shape: f32[256,1], index: 3, kind: input, shape index: {}]
  %s4 = inlined_call_operand.vmem [shape: f32[12,128], index: 4, kind: input, shape index: {}]
  %s5 = inlined_call_operand.vmem [shape: f32[4,128], index: 5, kind: input, shape index: {}]
  %s6 = inlined_call_operand.vmem [shape: f32[1,128], index: 6, kind: input, shape index: {}]
  %s7 = inlined_call_operand.hbm [shape: f32[256,128], index: 7, kind: output, shape index: {}]
  %s8 = sld [smem:[#allocation0]]
  $region69: #{tpu_custom_call.1} parent=0
    _
  %s10 = ssub.s32 1, %s8
  %s11 = scalar_select 0, %s10, %s8
  $region1: #{tpu_custom_call.1} parent=0
    #allocation3 [shape = 'u8[131072]{0}', space=vmem, size = 0x20000, scoped, tag = 'output window, operand 0']
    #allocation4 [shape = 's32[2]{0}', space=sflag, size = 0x8, scoped, tag = 'scoped memory for tpu_custom_call.1']
    %12 = vsyncpa [#allocation4], 0
    %s13 = scalar_lea.sflag [#allocation4], 1
    %14 = vsyncpa %s13, 0
    loop: start=0, step=1, limit=4
    $region2: #{tpu_custom_call.1} parent=1 // loop_pre_header
      _
    $region3: #{tpu_custom_call.1} parent=1 // loop_header
      %s16 = sphi 0, %s20
      %p17 = scmp.ge.s32.totalorder %s16, 4
      %s23 = sphi 0, %s35
      %s24 = sphi 0, %s31
      %s25 = sphi 0, %s23
      %s26 = sphi 0, %s24
      %s27 = sphi 0, %s25
      %s28 = sphi 0, %s26
      %s38 = sphi 0, %s40
      %s41 = sphi 0, %s38
      %s42 = sphi 0, %s41
      %s58 = sphi 0, %s42
      %s64 = sphi 0, %s66
      %s67 = sphi 0, %s64
      %s68 = sphi 0, %s67
      %s84 = sphi 0, %s68
      %s92 = sphi 0, %s94
      %s95 = sphi 0, %s92
      %s96 = sphi 0, %s95
      %s112 = sphi 0, %s96
      %s118 = sphi 0, %s120
      %s121 = sphi 0, %s118
      %s122 = sphi 0, %s121
      %s138 = sphi 0, %s122
      %s142 = sphi 0, %s142
      %s144 = sphi 0, %s142
      %s145 = sphi 0, %s144
      %s159 = sphi 0, %s145
      %s163 = sphi 0, %s163
      %s165 = sphi 0, %s163
      %s166 = sphi 0, %s165
      %s180 = sphi 0, %s166
      %s184 = sphi 0, %s184
      %s186 = sphi 0, %s184
      %s187 = sphi 0, %s186
      %s201 = sphi 0, %s187
      %s207 = sphi 0, %s209
      %s210 = sphi 0, %s207
      %s211 = sphi 0, %s210
      %s227 = sphi 0, %s211
    $region4: #{tpu_custom_call.1} parent=1 // loop_header_branch
      %19 = sbr.rel (%p17) target = $region8
    $region5: #{tpu_custom_call.1} parent=1 // loop_body
      %s21 = ssub.s32 %s16, 1
      %s22 = ssub.s32 %s16, 2
      %s29 = sadd.s32 1, %s24
      %p30 = scmp.ge.s32.totalorder %s29, 1
      %s31 = scalar_select %p30, 0, %s29
      %s32 = sadd.s32 1, %s23
      %s33 = scalar_select %p30, %s32, %s23
      %p34 = scmp.ge.s32.totalorder %s33, 2
      %s35 = scalar_select %p34, 0, %s33
      %s36 = ssub.s32 %s24, %s31
      %p37 = scmp.eq.s32.totalorder %s36, 0
      %s39 = sadd.s32 %s38, 1
      %s40 = scalar_select %p37, %s38, %s39
      %p43 = pneg %p37
      %p44 = scmp.eq.s32.totalorder %s16, 1
      %p45 = por %p43, %p44
      %p46 = scmp.ne.s32.totalorder %s38, %s41
      %p47 = scmp.eq.s32.totalorder %s16, 0
      %p48 = por %p46, %p47
      %p49 = scmp.ne.s32.totalorder %s38, %s41
      %p50 = scmp.eq.s32.totalorder %s21, 1
      %p51 = por %p49, %p50
      %p52 = scmp.ne.s32.totalorder %s41, %s42
      %p53 = scmp.eq.s32.totalorder %s21, 0
      %p54 = por %p52, %p53
      %p55 = scmp.ne.s32.totalorder %s41, %s42
      %p56 = scmp.eq.s32.totalorder %s22, 1
      %p57 = por %p55, %p56
      %p59 = scmp.ne.s32.totalorder %s42, %s58
      %p60 = scmp.eq.s32.totalorder %s22, 0
      %p61 = por %p59, %p60
      %s62 = ssub.s32 %s23, %s35
      %p63 = scmp.eq.s32.totalorder %s62, 0
      %s65 = sadd.s32 %s64, 1
      %s66 = scalar_select %p63, %s64, %s65
      %p69 = pneg %p63
      %p70 = scmp.eq.s32.totalorder %s16, 1
      %p71 = por %p69, %p70
      %p72 = scmp.ne.s32.totalorder %s64, %s67
      %p73 = scmp.eq.s32.totalorder %s16, 0
      %p74 = por %p72, %p73
      %p75 = scmp.ne.s32.totalorder %s64, %s67
      %p76 = scmp.eq.s32.totalorder %s21, 1
      %p77 = por %p75, %p76
      %p78 = scmp.ne.s32.totalorder %s67, %s68
      %p79 = scmp.eq.s32.totalorder %s21, 0
      %p80 = por %p78, %p79
      %p81 = scmp.ne.s32.totalorder %s67, %s68
      %p82 = scmp.eq.s32.totalorder %s22, 1
      %p83 = por %p81, %p82
      %p85 = scmp.ne.s32.totalorder %s68, %s84
      %p86 = scmp.eq.s32.totalorder %s22, 0
      %p87 = por %p85, %p86
      %s88 = ssub.s32 %s23, %s35
      %s89 = ssub.s32 %s24, %s31
      %s90 = sor.u32 %s88, %s89
      %p91 = scmp.eq.s32.totalorder %s90, 0
      %s93 = sadd.s32 %s92, 1
      %s94 = scalar_select %p91, %s92, %s93
      %p97 = pneg %p91
      %p98 = scmp.eq.s32.totalorder %s16, 1
      %p99 = por %p97, %p98
      %p100 = scmp.ne.s32.totalorder %s92, %s95
      %p101 = scmp.eq.s32.totalorder %s16, 0
      %p102 = por %p100, %p101
      %p103 = scmp.ne.s32.totalorder %s92, %s95
      %p104 = scmp.eq.s32.totalorder %s21, 1
      %p105 = por %p103, %p104
      %p106 = scmp.ne.s32.totalorder %s95, %s96
      %p107 = scmp.eq.s32.totalorder %s21, 0
      %p108 = por %p106, %p107
      %p109 = scmp.ne.s32.totalorder %s95, %s96
      %p110 = scmp.eq.s32.totalorder %s22, 1
      %p111 = por %p109, %p110
      %p113 = scmp.ne.s32.totalorder %s96, %s112
      %p114 = scmp.eq.s32.totalorder %s22, 0
      %p115 = por %p113, %p114
      %s116 = ssub.s32 %s23, %s35
      %p117 = scmp.eq.s32.totalorder %s116, 0
      %s119 = sadd.s32 %s118, 1
      %s120 = scalar_select %p117, %s118, %s119
      %p123 = pneg %p117
      %p124 = scmp.eq.s32.totalorder %s16, 1
      %p125 = por %p123, %p124
      %p126 = scmp.ne.s32.totalorder %s118, %s121
      %p127 = scmp.eq.s32.totalorder %s16, 0
      %p128 = por %p126, %p127
      %p129 = scmp.ne.s32.totalorder %s118, %s121
      %p130 = scmp.eq.s32.totalorder %s21, 1
      %p131 = por %p129, %p130
      %p132 = scmp.ne.s32.totalorder %s121, %s122
      %p133 = scmp.eq.s32.totalorder %s21, 0
      %p134 = por %p132, %p133
      %p135 = scmp.ne.s32.totalorder %s121, %s122
      %p136 = scmp.eq.s32.totalorder %s22, 1
      %p137 = por %p135, %p136
      %p139 = scmp.ne.s32.totalorder %s122, %s138
      %p140 = scmp.eq.s32.totalorder %s22, 0
      %p141 = por %p139, %p140
      %s143 = sadd.s32 %s142, 1
      %p146 = scmp.eq.s32.totalorder %s16, 1
      %p147 = scmp.ne.s32.totalorder %s142, %s144
      %p148 = scmp.eq.s32.totalorder %s16, 0
      %p149 = por %p147, %p148
      %p150 = scmp.ne.s32.totalorder %s142, %s144
      %p151 = scmp.eq.s32.totalorder %s21, 1
      %p152 = por %p150, %p151
      %p153 = scmp.ne.s32.totalorder %s144, %s145
      %p154 = scmp.eq.s32.totalorder %s21, 0
      %p155 = por %p153, %p154
      %p156 = scmp.ne.s32.totalorder %s144, %s145
      %p157 = scmp.eq.s32.totalorder %s22, 1
      %p158 = por %p156, %p157
      %p160 = scmp.ne.s32.totalorder %s145, %s159
      %p161 = scmp.eq.s32.totalorder %s22, 0
      %p162 = por %p160, %p161
      %s164 = sadd.s32 %s163, 1
      %p167 = scmp.eq.s32.totalorder %s16, 1
      %p168 = scmp.ne.s32.totalorder %s163, %s165
      %p169 = scmp.eq.s32.totalorder %s16, 0
      %p170 = por %p168, %p169
      %p171 = scmp.ne.s32.totalorder %s163, %s165
      %p172 = scmp.eq.s32.totalorder %s21, 1
      %p173 = por %p171, %p172
      %p174 = scmp.ne.s32.totalorder %s165, %s166
      %p175 = scmp.eq.s32.totalorder %s21, 0
      %p176 = por %p174, %p175
      %p177 = scmp.ne.s32.totalorder %s165, %s166
      %p178 = scmp.eq.s32.totalorder %s22, 1
      %p179 = por %p177, %p178
      %p181 = scmp.ne.s32.totalorder %s166, %s180
      %p182 = scmp.eq.s32.totalorder %s22, 0
      %p183 = por %p181, %p182
      %s185 = sadd.s32 %s184, 1
      %p188 = scmp.eq.s32.totalorder %s16, 1
      %p189 = scmp.ne.s32.totalorder %s184, %s186
      %p190 = scmp.eq.s32.totalorder %s16, 0
      %p191 = por %p189, %p190
      %p192 = scmp.ne.s32.totalorder %s184, %s186
      %p193 = scmp.eq.s32.totalorder %s21, 1
      %p194 = por %p192, %p193
      %p195 = scmp.ne.s32.totalorder %s186, %s187
      %p196 = scmp.eq.s32.totalorder %s21, 0
      %p197 = por %p195, %p196
      %p198 = scmp.ne.s32.totalorder %s186, %s187
      %p199 = scmp.eq.s32.totalorder %s22, 1
      %p200 = por %p198, %p199
      %p202 = scmp.ne.s32.totalorder %s187, %s201
      %p203 = scmp.eq.s32.totalorder %s22, 0
      %p204 = por %p202, %p203
      %s205 = ssub.s32 %s23, %s35
      %p206 = scmp.eq.s32.totalorder %s205, 0
      %s208 = sadd.s32 %s207, 1
      %s209 = scalar_select %p206, %s207, %s208
      %p212 = pneg %p206
      %p213 = scmp.eq.s32.totalorder %s16, 1
      %p214 = por %p212, %p213
      %p215 = scmp.ne.s32.totalorder %s207, %s210
      %p216 = scmp.eq.s32.totalorder %s16, 0
      %p217 = por %p215, %p216
      %p218 = scmp.ne.s32.totalorder %s207, %s210
      %p219 = scmp.eq.s32.totalorder %s21, 1
      %p220 = por %p218, %p219
      %p221 = scmp.ne.s32.totalorder %s210, %s211
      %p222 = scmp.eq.s32.totalorder %s21, 0
      %p223 = por %p221, %p222
      %p224 = scmp.ne.s32.totalorder %s210, %s211
      %p225 = scmp.eq.s32.totalorder %s22, 1
      %p226 = por %p224, %p225
      %p228 = scmp.ne.s32.totalorder %s211, %s227
      %p229 = scmp.eq.s32.totalorder %s22, 0
      %p230 = por %p228, %p229
      %p231 = scmp.le.s32.totalorder 1, %s16
      %p232 = scmp.lt.s32.totalorder %s16, 3
      %p233 = pnand %p231, %p232
      %p234 = pneg %p233
      // Predicated region
      $region9: #{tpu_custom_call.1} parent=5 // pred_check
        _
      $region10: #{tpu_custom_call.1} parent=5 // pred_check_branch
        %236 = sbr.rel (%p233) target = $region12
      $region11: #{tpu_custom_call.1} parent=5 // pred_region
        %s237 = ssub.s32 %s16, 1
        // Predicated region
        $region13: #{tpu_custom_call.1} parent=11 // pred_check
          %p238 = pneg %p54
        $region14: #{tpu_custom_call.1} parent=11 // pred_check_branch
          %240 = sbr.rel (%p238) target = $region16
        $region15: #{tpu_custom_call.1} parent=11 // pred_region
          %s241 = smul.u32 64, %s26
          %p242 = scmp.lt.s32.totalorder %s241, 63
          %s243 = scalar_select %p242, %s241, 63
          %s244 = smul.addr %s243, 8
          %s245 = scalar_lea.vmem %s0, %s244
          %s246 = smul.u32 64, %s26
        $region16: #{tpu_custom_call.1} parent=11 // pred_fallthru
          _
        // Predicated region
        $region17: #{tpu_custom_call.1} parent=11 // pred_check
          %p247 = pneg %p155
        $region18: #{tpu_custom_call.1} parent=11 // pred_check_branch
          %249 = sbr.rel (%p247) target = $region20
        $region19: #{tpu_custom_call.1} parent=11 // pred_region
          _
        $region20: #{tpu_custom_call.1} parent=11 // pred_fallthru
          _
        // Predicated region
        $region21: #{tpu_custom_call.1} parent=11 // pred_check
          %p250 = pneg %p176
        $region22: #{tpu_custom_call.1} parent=11 // pred_check_branch
          %252 = sbr.rel (%p250) target = $region24
        $region23: #{tpu_custom_call.1} parent=11 // pred_region
          _
        $region24: #{tpu_custom_call.1} parent=11 // pred_fallthru
          _
        // Predicated region
        $region25: #{tpu_custom_call.1} parent=11 // pred_check
          %p253 = pneg %p197
        $region26: #{tpu_custom_call.1} parent=11 // pred_check_branch
          %255 = sbr.rel (%p253) target = $region28
        $region27: #{tpu_custom_call.1} parent=11 // pred_region
          _
        $region28: #{tpu_custom_call.1} parent=11 // pred_fallthru
          _
      $region12: #{tpu_custom_call.1} parent=5 // pred_fallthru
        _
      %p256 = scmp.lt.s32.totalorder %s16, 2
      // Predicated region
      $region29: #{tpu_custom_call.1} parent=5 // pred_check
        %p257 = pneg %p256
      $region30: #{tpu_custom_call.1} parent=5 // pred_check_branch
        %259 = sbr.rel (%p257) target = $region32
      $region31: #{tpu_custom_call.1} parent=5 // pred_region
        // Predicated region
        $region33: #{tpu_custom_call.1} parent=31 // pred_check
          %p260 = pneg %p74
        $region34: #{tpu_custom_call.1} parent=31 // pred_check_branch
          %262 = sbr.rel (%p260) target = $region36
        $region35: #{tpu_custom_call.1} parent=31 // pred_region
          %s263 = smul.u32 16, %s23
          %p264 = scmp.lt.s32.totalorder %s263, 31
          %s265 = scalar_select %p264, %s263, 31
          %s266 = smul.addr %s265, 8
          %s267 = scalar_lea.vmem %s1, %s266
          %s268 = smul.u32 16, %s23
        $region36: #{tpu_custom_call.1} parent=31 // pred_fallthru
          _
        // Predicated region
        $region37: #{tpu_custom_call.1} parent=31 // pred_check
          %p269 = pneg %p102
        $region38: #{tpu_custom_call.1} parent=31 // pred_check_branch
          %271 = sbr.rel (%p269) target = $region40
        $region39: #{tpu_custom_call.1} parent=31 // pred_region
          %s272 = smul.u32 16, %s23
          %s273 = smul.u32 4, %s24
          %p274 = scmp.lt.s32.totalorder %s272, 31
          %s275 = scalar_select %p274, %s272, 31
          %p276 = scmp.lt.s32.totalorder %s273, 3
          %s277 = scalar_select %p276, %s273, 3
          %s278 = smul.addr %s275, 4
          %s279 = sadd.s32 %s277, %s278
          %s280 = smul.addr %s279, 4
          %s281 = scalar_lea.vmem %s2, %s280
          %s282 = smul.u32 16, %s23
          %s283 = smul.u32 4, %s24
        $region40: #{tpu_custom_call.1} parent=31 // pred_fallthru
          _
        // Predicated region
        $region41: #{tpu_custom_call.1} parent=31 // pred_check
          %p284 = pneg %p128
        $region42: #{tpu_custom_call.1} parent=31 // pred_check_branch
          %286 = sbr.rel (%p284) target = $region44
        $region43: #{tpu_custom_call.1} parent=31 // pred_region
          %s287 = smul.u32 16, %s23
          %p288 = scmp.lt.s32.totalorder %s287, 31
          %s289 = scalar_select %p288, %s287, 31
          %s290 = smul.addr %s289, 8
          %s291 = scalar_lea.vmem %s3, %s290
          %s292 = smul.u32 16, %s23
        $region44: #{tpu_custom_call.1} parent=31 // pred_fallthru
          _
      $region32: #{tpu_custom_call.1} parent=5 // pred_fallthru
        _
      %p293 = scmp.le.s32.totalorder 1, %s16
      %p294 = scmp.lt.s32.totalorder %s16, 3
      %p295 = pnand %p293, %p294
      %p296 = pneg %p295
      // Predicated region
      $region45: #{tpu_custom_call.1} parent=5 // pred_check
        _
      $region46: #{tpu_custom_call.1} parent=5 // pred_check_branch
        %298 = sbr.rel (%p295) target = $region48
      $region47: #{tpu_custom_call.1} parent=5 // pred_region
        %s299 = ssub.s32 %s16, 1
        %s300 = smul.u32 64, %s26
        %p301 = scmp.lt.s32.totalorder %s300, 63
        %s302 = scalar_select %p301, %s300, 63
        %s303 = smul.addr %s302, 8
        %s304 = scalar_lea.vmem %s0, %s303
        %p305 = pneg %p54
        %p306 = pneg %p51
        %s307 = smul.u32 16, %s25
        %p308 = scmp.lt.s32.totalorder %s307, 31
        %s309 = scalar_select %p308, %s307, 31
        %s310 = smul.addr %s309, 8
        %s311 = scalar_lea.vmem %s1, %s310
        %p312 = pneg %p80
        %p313 = pneg %p77
        %s314 = smul.u32 16, %s25
        %s315 = smul.u32 4, %s26
        %p316 = scmp.lt.s32.totalorder %s314, 31
        %s317 = scalar_select %p316, %s314, 31
        %p318 = scmp.lt.s32.totalorder %s315, 3
        %s319 = scalar_select %p318, %s315, 3
        %s320 = smul.addr %s317, 4
        %s321 = sadd.s32 %s319, %s320
        %s322 = smul.addr %s321, 4
        %s323 = scalar_lea.vmem %s2, %s322
        %p324 = pneg %p108
        %p325 = pneg %p105
        %s326 = smul.u32 16, %s25
        %p327 = scmp.lt.s32.totalorder %s326, 31
        %s328 = scalar_select %p327, %s326, 31
        %s329 = smul.addr %s328, 8
        %s330 = scalar_lea.vmem %s3, %s329
        %p331 = pneg %p134
        %p332 = pneg %p131
        %p333 = pneg %p155
        %p334 = pneg %p152
        %p335 = pneg %p176
        %p336 = pneg %p173
        %p337 = pneg %p197
        %p338 = pneg %p194
        %p339 = pneg %p223
        %p340 = pneg %p220
        %s341 = sand.u32 %s210, 1
        %s342 = scalar_lea.sflag [#allocation4], %s341
        %s343 = sand.u32 %s210, 1
        %s344 = smul.addr %s343, 128
        %s345 = scalar_lea.vmem [#allocation3], %s344
        %s346 = smul.u32 64, %s26
        %p347 = scmp.lt.s32.totalorder %s346, 63
        %s348 = scalar_select %p347, %s346, 63
        %s349 = smul.addr %s348, 8
        %s350 = scalar_lea.vmem %s0, %s349
        %s351 = smul.u32 64, %s26
        %s352 = smul.u32 16, %s25
        %p353 = scmp.lt.s32.totalorder %s352, 31
        %s354 = scalar_select %p353, %s352, 31
        %s355 = smul.addr %s354, 8
        %s356 = scalar_lea.vmem %s1, %s355
        %s357 = smul.u32 16, %s25
        %s358 = smul.u32 16, %s25
        %s359 = smul.u32 4, %s26
        %p360 = scmp.lt.s32.totalorder %s358, 31
        %s361 = scalar_select %p360, %s358, 31
        %p362 = scmp.lt.s32.totalorder %s359, 3
        %s363 = scalar_select %p362, %s359, 3
        %s364 = smul.addr %s361, 4
        %s365 = sadd.s32 %s363, %s364
        %s366 = smul.addr %s365, 4
        %s367 = scalar_lea.vmem %s2, %s366
        %s368 = smul.u32 16, %s25
        %s369 = smul.u32 4, %s26
        %s370 = smul.u32 16, %s25
        %p371 = scmp.lt.s32.totalorder %s370, 31
        %s372 = scalar_select %p371, %s370, 31
        %s373 = smul.addr %s372, 8
        %s374 = scalar_lea.vmem %s3, %s373
        %s375 = smul.u32 16, %s25
        %s376 = smul.u32 16, %s25
        %p377 = scmp.eq.s32.totalorder %s26, 0
        // Predicated region
        $region49: #{tpu_custom_call.1} parent=47 // pred_check
          %p378 = pneg %p377
        $region50: #{tpu_custom_call.1} parent=47 // pred_check_branch
          %380 = sbr.rel (%p378) target = $region52
        $region51: #{tpu_custom_call.1} parent=47 // pred_region
          %381 = vst [vmem:[#allocation2] sm:$0xff] 0.0
          %382 = vst [vmem:[#allocation2 + $0x8] sm:$0xff] 0.0
          %383 = vst [vmem:[#allocation2 + $0x10] sm:$0xff] 0.0
          %384 = vst [vmem:[#allocation2 + $0x18] sm:$0xff] 0.0
          %385 = vst [vmem:[#allocation2 + $0x20] sm:$0xff] 0.0
          %386 = vst [vmem:[#allocation2 + $0x28] sm:$0xff] 0.0
          %387 = vst [vmem:[#allocation2 + $0x30] sm:$0xff] 0.0
          %388 = vst [vmem:[#allocation2 + $0x38] sm:$0xff] 0.0
          %389 = vst [vmem:[#allocation2 + $0x40] sm:$0xff] 0.0
          %390 = vst [vmem:[#allocation2 + $0x48] sm:$0xff] 0.0
          %391 = vst [vmem:[#allocation2 + $0x50] sm:$0xff] 0.0
          %392 = vst [vmem:[#allocation2 + $0x58] sm:$0xff] 0.0
          %393 = vst [vmem:[#allocation2 + $0x60] sm:$0xff] 0.0
          %394 = vst [vmem:[#allocation2 + $0x68] sm:$0xff] 0.0
          %395 = vst [vmem:[#allocation2 + $0x70] sm:$0xff] 0.0
          %396 = vst [vmem:[#allocation2 + $0x78] sm:$0xff] 0.0
        $region52: #{tpu_custom_call.1} parent=47 // pred_fallthru
          _
        %v397 = vld [vmem:[%s350] sm:$0xff]
        %v398 = vld [vmem:[%s350 + $0x8] sm:$0xff]
        %v399 = vld [vmem:[%s350 + $0x10] sm:$0xff]
        %v400 = vld [vmem:[%s350 + $0x18] sm:$0xff]
        %v401 = vld [vmem:[%s350 + $0x20] sm:$0xff]
        %v402 = vld [vmem:[%s350 + $0x28] sm:$0xff]
        %v403 = vld [vmem:[%s350 + $0x30] sm:$0xff]
        %v404 = vld [vmem:[%s350 + $0x38] sm:$0xff]
        %v405 = vld [vmem:[%s350 + $0x40] sm:$0xff]
        %v406 = vld [vmem:[%s350 + $0x48] sm:$0xff]
        %v407 = vld [vmem:[%s350 + $0x50] sm:$0xff]
        %v408 = vld [vmem:[%s350 + $0x58] sm:$0xff]
        %v409 = vld [vmem:[%s350 + $0x60] sm:$0xff]
        %v410 = vld [vmem:[%s350 + $0x68] sm:$0xff]
        %v411 = vld [vmem:[%s350 + $0x70] sm:$0xff]
        %v412 = vld [vmem:[%s350 + $0x78] sm:$0xff]
        %v413 = vld [vmem:[%s350 + $0x80] sm:$0xff]
        %v414 = vld [vmem:[%s350 + $0x88] sm:$0xff]
        %v415 = vld [vmem:[%s350 + $0x90] sm:$0xff]
        %v416 = vld [vmem:[%s350 + $0x98] sm:$0xff]
        %v417 = vld [vmem:[%s350 + $0xa0] sm:$0xff]
        %v418 = vld [vmem:[%s350 + $0xa8] sm:$0xff]
        %v419 = vld [vmem:[%s350 + $0xb0] sm:$0xff]
        %v420 = vld [vmem:[%s350 + $0xb8] sm:$0xff]
        %v421 = vld [vmem:[%s350 + $0xc0] sm:$0xff]
        %v422 = vld [vmem:[%s350 + $0xc8] sm:$0xff]
        %v423 = vld [vmem:[%s350 + $0xd0] sm:$0xff]
        %v424 = vld [vmem:[%s350 + $0xd8] sm:$0xff]
        %v425 = vld [vmem:[%s350 + $0xe0] sm:$0xff]
        %v426 = vld [vmem:[%s350 + $0xe8] sm:$0xff]
        %v427 = vld [vmem:[%s350 + $0xf0] sm:$0xff]
        %v428 = vld [vmem:[%s350 + $0xf8] sm:$0xff]
        %v429 = vld [vmem:[%s350 + $0x100] sm:$0xff]
        %v430 = vld [vmem:[%s350 + $0x108] sm:$0xff]
        %v431 = vld [vmem:[%s350 + $0x110] sm:$0xff]
        %v432 = vld [vmem:[%s350 + $0x118] sm:$0xff]
        %v433 = vld [vmem:[%s350 + $0x120] sm:$0xff]
        %v434 = vld [vmem:[%s350 + $0x128] sm:$0xff]
        %v435 = vld [vmem:[%s350 + $0x130] sm:$0xff]
        %v436 = vld [vmem:[%s350 + $0x138] sm:$0xff]
        %v437 = vld [vmem:[%s350 + $0x140] sm:$0xff]
        %v438 = vld [vmem:[%s350 + $0x148] sm:$0xff]
        %v439 = vld [vmem:[%s350 + $0x150] sm:$0xff]
        %v440 = vld [vmem:[%s350 + $0x158] sm:$0xff]
        %v441 = vld [vmem:[%s350 + $0x160] sm:$0xff]
        %v442 = vld [vmem:[%s350 + $0x168] sm:$0xff]
        %v443 = vld [vmem:[%s350 + $0x170] sm:$0xff]
        %v444 = vld [vmem:[%s350 + $0x178] sm:$0xff]
        %v445 = vld [vmem:[%s350 + $0x180] sm:$0xff]
        %v446 = vld [vmem:[%s350 + $0x188] sm:$0xff]
        %v447 = vld [vmem:[%s350 + $0x190] sm:$0xff]
        %v448 = vld [vmem:[%s350 + $0x198] sm:$0xff]
        %v449 = vld [vmem:[%s350 + $0x1a0] sm:$0xff]
        %v450 = vld [vmem:[%s350 + $0x1a8] sm:$0xff]
        %v451 = vld [vmem:[%s350 + $0x1b0] sm:$0xff]
        %v452 = vld [vmem:[%s350 + $0x1b8] sm:$0xff]
        %v453 = vld [vmem:[%s350 + $0x1c0] sm:$0xff]
        %v454 = vld [vmem:[%s350 + $0x1c8] sm:$0xff]
        %v455 = vld [vmem:[%s350 + $0x1d0] sm:$0xff]
        %v456 = vld [vmem:[%s350 + $0x1d8] sm:$0xff]
        %v457 = vld [vmem:[%s350 + $0x1e0] sm:$0xff]
        %v458 = vld [vmem:[%s350 + $0x1e8] sm:$0xff]
        %v459 = vld [vmem:[%s350 + $0x1f0] sm:$0xff]
        %v460 = vld [vmem:[%s350 + $0x1f8] sm:$0xff]
        %v461 = vld [vmem:[%s4] sm:$0xff]
        %v462 = vld [vmem:[%s4 + $0x8] sm:$0xf]
        %vm463 = vcmask 97280
        %v465 = vsel %vm463, %v397, 0
        %v468 = vsel %vm463, %v398, 0
        %v471 = vsel %vm463, %v399, 0
        %v474 = vsel %vm463, %v400, 0
        %v477 = vsel %vm463, %v401, 0
        %v480 = vsel %vm463, %v402, 0
        %v483 = vsel %vm463, %v403, 0
        %v486 = vsel %vm463, %v404, 0
        %v489 = vsel %vm463, %v405, 0
        %v492 = vsel %vm463, %v406, 0
        %v495 = vsel %vm463, %v407, 0
        %v498 = vsel %vm463, %v408, 0
        %v501 = vsel %vm463, %v409, 0
        %v504 = vsel %vm463, %v410, 0
        %v507 = vsel %vm463, %v411, 0
        %v510 = vsel %vm463, %v412, 0
        %v513 = vsel %vm463, %v413, 0
        %v516 = vsel %vm463, %v414, 0
        %v519 = vsel %vm463, %v415, 0
        %v522 = vsel %vm463, %v416, 0
        %v525 = vsel %vm463, %v417, 0
        %v528 = vsel %vm463, %v418, 0
        %v531 = vsel %vm463, %v419, 0
        %v534 = vsel %vm463, %v420, 0
        %v537 = vsel %vm463, %v421, 0
        %v540 = vsel %vm463, %v422, 0
        %v543 = vsel %vm463, %v423, 0
        %v546 = vsel %vm463, %v424, 0
        %v549 = vsel %vm463, %v425, 0
        %v552 = vsel %vm463, %v426, 0
        %v555 = vsel %vm463, %v427, 0
        %v558 = vsel %vm463, %v428, 0
        %v561 = vsel %vm463, %v429, 0
        %v564 = vsel %vm463, %v430, 0
        %v567 = vsel %vm463, %v431, 0
        %v570 = vsel %vm463, %v432, 0
        %v573 = vsel %vm463, %v433, 0
        %v576 = vsel %vm463, %v434, 0
        %v579 = vsel %vm463, %v435, 0
        %v582 = vsel %vm463, %v436, 0
        %v585 = vsel %vm463, %v437, 0
        %v588 = vsel %vm463, %v438, 0
        %v591 = vsel %vm463, %v439, 0
        %v594 = vsel %vm463, %v440, 0
        %v597 = vsel %vm463, %v441, 0
        %v600 = vsel %vm463, %v442, 0
        %v603 = vsel %vm463, %v443, 0
        %v606 = vsel %vm463, %v444, 0
        %v609 = vsel %vm463, %v445, 0
        %v612 = vsel %vm463, %v446, 0
        %v615 = vsel %vm463, %v447, 0
        %v618 = vsel %vm463, %v448, 0
        %v621 = vsel %vm463, %v449, 0
        %v624 = vsel %vm463, %v450, 0
        %v627 = vsel %vm463, %v451, 0
        %v630 = vsel %vm463, %v452, 0
        %v633 = vsel %vm463, %v453, 0
        %v636 = vsel %vm463, %v454, 0
        %v639 = vsel %vm463, %v455, 0
        %v642 = vsel %vm463, %v456, 0
        %v645 = vsel %vm463, %v457, 0
        %v648 = vsel %vm463, %v458, 0
        %v651 = vsel %vm463, %v459, 0
        %v654 = vsel %vm463, %v460, 0
        %vm656 = vcmask 1043456
        %v658 = vsel %vm656, %v462, 0
        %660 = vmatpush.msra.mxu0 0.0
        %661 = vmatpush.msra.mxu0 0.0
        %662 = vmatpush.msra.mxu0 0.0
        %663 = vmatpush.msra.mxu0 0.0
        %664 = vmatpush.msra.mxu0 0.0
        %665 = vmatpush.msra.mxu0 0.0
        %666 = vmatpush.msra.mxu0 0.0
        %667 = vmatpush.msra.mxu0 0.0
        %668 = vmatpush.msra.mxu0 0.0
        %669 = vmatpush.msra.mxu0 0.0
        %670 = vmatpush.msra.mxu0 0.0
        %671 = vmatpush.msra.mxu0 0.0
        %672 = vmatpush.msra.mxu0 0.0
        %673 = vmatpush.msra.mxu0 0.0
        %674 = vmatpush.msra.mxu0 %v658
        %675 = vmatpush.msra.mxu0 %v461
        %676 = vmatmul.f32.gmra.mxu0 %v465
        %v677 = vpop.f32.mrf.mxu0
        %v678 = vadd.f32 0.0, %v677
        %679 = vmatmul.f32.gmra.mxu0 %v468
        %v680 = vpop.f32.mrf.mxu0
        %v681 = vadd.f32 0.0, %v680
        %682 = vmatmul.f32.gmra.mxu0 %v471
        %v683 = vpop.f32.mrf.mxu0
        %v684 = vadd.f32 0.0, %v683
        %685 = vmatmul.f32.gmra.mxu0 %v474
        %v686 = vpop.f32.mrf.mxu0
        %v687 = vadd.f32 0.0, %v686
        %688 = vmatmul.f32.gmra.mxu0 %v477
        %v689 = vpop.f32.mrf.mxu0
        %v690 = vadd.f32 0.0, %v689
        %691 = vmatmul.f32.gmra.mxu0 %v480
        %v692 = vpop.f32.mrf.mxu0
        %v693 = vadd.f32 0.0, %v692
        %694 = vmatmul.f32.gmra.mxu0 %v483
        %v695 = vpop.f32.mrf.mxu0
        %v696 = vadd.f32 0.0, %v695
        %697 = vmatmul.f32.gmra.mxu0 %v486
        %v698 = vpop.f32.mrf.mxu0
        %v699 = vadd.f32 0.0, %v698
        %700 = vmatmul.f32.gmra.mxu0 %v489
        %v701 = vpop.f32.mrf.mxu0
        %v702 = vadd.f32 0.0, %v701
        %703 = vmatmul.f32.gmra.mxu0 %v492
        %v704 = vpop.f32.mrf.mxu0
        %v705 = vadd.f32 0.0, %v704
        %706 = vmatmul.f32.gmra.mxu0 %v495
        %v707 = vpop.f32.mrf.mxu0
        %v708 = vadd.f32 0.0, %v707
        %709 = vmatmul.f32.gmra.mxu0 %v498
        %v710 = vpop.f32.mrf.mxu0
        %v711 = vadd.f32 0.0, %v710
        %712 = vmatmul.f32.gmra.mxu0 %v501
        %v713 = vpop.f32.mrf.mxu0
        %v714 = vadd.f32 0.0, %v713
        %715 = vmatmul.f32.gmra.mxu0 %v504
        %v716 = vpop.f32.mrf.mxu0
        %v717 = vadd.f32 0.0, %v716
        %718 = vmatmul.f32.gmra.mxu0 %v507
        %v719 = vpop.f32.mrf.mxu0
        %v720 = vadd.f32 0.0, %v719
        %721 = vmatmul.f32.gmra.mxu0 %v510
        %v722 = vpop.f32.mrf.mxu0
        %v723 = vadd.f32 0.0, %v722
        %724 = vmatmul.f32.gmra.mxu0 %v513
        %v725 = vpop.f32.mrf.mxu0
        %v726 = vadd.f32 0.0, %v725
        %727 = vmatmul.f32.gmra.mxu0 %v516
        %v728 = vpop.f32.mrf.mxu0
        %v729 = vadd.f32 0.0, %v728
        %730 = vmatmul.f32.gmra.mxu0 %v519
        %v731 = vpop.f32.mrf.mxu0
        %v732 = vadd.f32 0.0, %v731
        %733 = vmatmul.f32.gmra.mxu0 %v522
        %v734 = vpop.f32.mrf.mxu0
        %v735 = vadd.f32 0.0, %v734
        %736 = vmatmul.f32.gmra.mxu0 %v525
        %v737 = vpop.f32.mrf.mxu0
        %v738 = vadd.f32 0.0, %v737
        %739 = vmatmul.f32.gmra.mxu0 %v528
        %v740 = vpop.f32.mrf.mxu0
        %v741 = vadd.f32 0.0, %v740
        %742 = vmatmul.f32.gmra.mxu0 %v531
        %v743 = vpop.f32.mrf.mxu0
        %v744 = vadd.f32 0.0, %v743
        %745 = vmatmul.f32.gmra.mxu0 %v534
        %v746 = vpop.f32.mrf.mxu0
        %v747 = vadd.f32 0.0, %v746
        %748 = vmatmul.f32.gmra.mxu0 %v537
        %v749 = vpop.f32.mrf.mxu0
        %v750 = vadd.f32 0.0, %v749
        %751 = vmatmul.f32.gmra.mxu0 %v540
        %v752 = vpop.f32.mrf.mxu0
        %v753 = vadd.f32 0.0, %v752
        %754 = vmatmul.f32.gmra.mxu0 %v543
        %v755 = vpop.f32.mrf.mxu0
        %v756 = vadd.f32 0.0, %v755
        %757 = vmatmul.f32.gmra.mxu0 %v546
        %v758 = vpop.f32.mrf.mxu0
        %v759 = vadd.f32 0.0, %v758
        %760 = vmatmul.f32.gmra.mxu0 %v549
        %v761 = vpop.f32.mrf.mxu0
        %v762 = vadd.f32 0.0, %v761
        %763 = vmatmul.f32.gmra.mxu0 %v552
        %v764 = vpop.f32.mrf.mxu0
        %v765 = vadd.f32 0.0, %v764
        %766 = vmatmul.f32.gmra.mxu0 %v555
        %v767 = vpop.f32.mrf.mxu0
        %v768 = vadd.f32 0.0, %v767
        %769 = vmatmul.f32.gmra.mxu0 %v558
        %v770 = vpop.f32.mrf.mxu0
        %v771 = vadd.f32 0.0, %v770
        %772 = vmatmul.f32.gmra.mxu0 %v561
        %v773 = vpop.f32.mrf.mxu0
        %v774 = vadd.f32 0.0, %v773
        %775 = vmatmul.f32.gmra.mxu0 %v564
        %v776 = vpop.f32.mrf.mxu0
        %v777 = vadd.f32 0.0, %v776
        %778 = vmatmul.f32.gmra.mxu0 %v567
        %v779 = vpop.f32.mrf.mxu0
        %v780 = vadd.f32 0.0, %v779
        %781 = vmatmul.f32.gmra.mxu0 %v570
        %v782 = vpop.f32.mrf.mxu0
        %v783 = vadd.f32 0.0, %v782
        %784 = vmatmul.f32.gmra.mxu0 %v573
        %v785 = vpop.f32.mrf.mxu0
        %v786 = vadd.f32 0.0, %v785
        %787 = vmatmul.f32.gmra.mxu0 %v576
        %v788 = vpop.f32.mrf.mxu0
        %v789 = vadd.f32 0.0, %v788
        %790 = vmatmul.f32.gmra.mxu0 %v579
        %v791 = vpop.f32.mrf.mxu0
        %v792 = vadd.f32 0.0, %v791
        %793 = vmatmul.f32.gmra.mxu0 %v582
        %v794 = vpop.f32.mrf.mxu0
        %v795 = vadd.f32 0.0, %v794
        %796 = vmatmul.f32.gmra.mxu0 %v585
        %v797 = vpop.f32.mrf.mxu0
        %v798 = vadd.f32 0.0, %v797
        %799 = vmatmul.f32.gmra.mxu0 %v588
        %v800 = vpop.f32.mrf.mxu0
        %v801 = vadd.f32 0.0, %v800
        %802 = vmatmul.f32.gmra.mxu0 %v591
        %v803 = vpop.f32.mrf.mxu0
        %v804 = vadd.f32 0.0, %v803
        %805 = vmatmul.f32.gmra.mxu0 %v594
        %v806 = vpop.f32.mrf.mxu0
        %v807 = vadd.f32 0.0, %v806
        %808 = vmatmul.f32.gmra.mxu0 %v597
        %v809 = vpop.f32.mrf.mxu0
        %v810 = vadd.f32 0.0, %v809
        %811 = vmatmul.f32.gmra.mxu0 %v600
        %v812 = vpop.f32.mrf.mxu0
        %v813 = vadd.f32 0.0, %v812
        %814 = vmatmul.f32.gmra.mxu0 %v603
        %v815 = vpop.f32.mrf.mxu0
        %v816 = vadd.f32 0.0, %v815
        %817 = vmatmul.f32.gmra.mxu0 %v606
        %v818 = vpop.f32.mrf.mxu0
        %v819 = vadd.f32 0.0, %v818
        %820 = vmatmul.f32.gmra.mxu0 %v609
        %v821 = vpop.f32.mrf.mxu0
        %v822 = vadd.f32 0.0, %v821
        %823 = vmatmul.f32.gmra.mxu0 %v612
        %v824 = vpop.f32.mrf.mxu0
        %v825 = vadd.f32 0.0, %v824
        %826 = vmatmul.f32.gmra.mxu0 %v615
        %v827 = vpop.f32.mrf.mxu0
        %v828 = vadd.f32 0.0, %v827
        %829 = vmatmul.f32.gmra.mxu0 %v618
        %v830 = vpop.f32.mrf.mxu0
        %v831 = vadd.f32 0.0, %v830
        %832 = vmatmul.f32.gmra.mxu0 %v621
        %v833 = vpop.f32.mrf.mxu0
        %v834 = vadd.f32 0.0, %v833
        %835 = vmatmul.f32.gmra.mxu0 %v624
        %v836 = vpop.f32.mrf.mxu0
        %v837 = vadd.f32 0.0, %v836
        %838 = vmatmul.f32.gmra.mxu0 %v627
        %v839 = vpop.f32.mrf.mxu0
        %v840 = vadd.f32 0.0, %v839
        %841 = vmatmul.f32.gmra.mxu0 %v630
        %v842 = vpop.f32.mrf.mxu0
        %v843 = vadd.f32 0.0, %v842
        %844 = vmatmul.f32.gmra.mxu0 %v633
        %v845 = vpop.f32.mrf.mxu0
        %v846 = vadd.f32 0.0, %v845
        %847 = vmatmul.f32.gmra.mxu0 %v636
        %v848 = vpop.f32.mrf.mxu0
        %v849 = vadd.f32 0.0, %v848
        %850 = vmatmul.f32.gmra.mxu0 %v639
        %v851 = vpop.f32.mrf.mxu0
        %v852 = vadd.f32 0.0, %v851
        %853 = vmatmul.f32.gmra.mxu0 %v642
        %v854 = vpop.f32.mrf.mxu0
        %v855 = vadd.f32 0.0, %v854
        %856 = vmatmul.f32.gmra.mxu0 %v645
        %v857 = vpop.f32.mrf.mxu0
        %v858 = vadd.f32 0.0, %v857
        %859 = vmatmul.f32.gmra.mxu0 %v648
        %v860 = vpop.f32.mrf.mxu0
        %v861 = vadd.f32 0.0, %v860
        %862 = vmatmul.f32.gmra.mxu0 %v651
        %v863 = vpop.f32.mrf.mxu0
        %v864 = vadd.f32 0.0, %v863
        %865 = vmatmul.f32.gmra.mxu0 %v654
        %v866 = vpop.f32.mrf.mxu0
        %v867 = vadd.f32 0.0, %v866
        %868 = vdwg.mxu0
        %v869 = vld [vmem:[#allocation2] sm:$0xff]
        %v870 = vld [vmem:[#allocation2 + $0x8] sm:$0xff]
        %v871 = vld [vmem:[#allocation2 + $0x10] sm:$0xff]
        %v872 = vld [vmem:[#allocation2 + $0x18] sm:$0xff]
        %v873 = vld [vmem:[#allocation2 + $0x20] sm:$0xff]
        %v874 = vld [vmem:[#allocation2 + $0x28] sm:$0xff]
        %v875 = vld [vmem:[#allocation2 + $0x30] sm:$0xff]
        %v876 = vld [vmem:[#allocation2 + $0x38] sm:$0xff]
        %v877 = vld [vmem:[#allocation2 + $0x40] sm:$0xff]
        %v878 = vld [vmem:[#allocation2 + $0x48] sm:$0xff]
        %v879 = vld [vmem:[#allocation2 + $0x50] sm:$0xff]
        %v880 = vld [vmem:[#allocation2 + $0x58] sm:$0xff]
        %v881 = vld [vmem:[#allocation2 + $0x60] sm:$0xff]
        %v882 = vld [vmem:[#allocation2 + $0x68] sm:$0xff]
        %v883 = vld [vmem:[#allocation2 + $0x70] sm:$0xff]
        %v884 = vld [vmem:[#allocation2 + $0x78] sm:$0xff]
        %v885 = vld [vmem:[%s367] sm:$0xff]
        %v886 = vld [vmem:[%s367 + $0x8] sm:$0xff]
        %v887 = vld [vmem:[%s367 + $0x10] sm:$0xff]
        %v888 = vld [vmem:[%s367 + $0x18] sm:$0xff]
        %v889 = vld [vmem:[%s367 + $0x20] sm:$0xff]
        %v890 = vld [vmem:[%s367 + $0x28] sm:$0xff]
        %v891 = vld [vmem:[%s367 + $0x30] sm:$0xff]
        %v892 = vld [vmem:[%s367 + $0x38] sm:$0xff]
        %v893 = vld [vmem:[%s367 + $0x40] sm:$0xff]
        %v894 = vld [vmem:[%s367 + $0x48] sm:$0xff]
        %v895 = vld [vmem:[%s367 + $0x50] sm:$0xff]
        %v896 = vld [vmem:[%s367 + $0x58] sm:$0xff]
        %v897 = vld [vmem:[%s367 + $0x60] sm:$0xff]
        %v898 = vld [vmem:[%s367 + $0x68] sm:$0xff]
        %v899 = vld [vmem:[%s367 + $0x70] sm:$0xff]
        %v900 = vld [vmem:[%s367 + $0x78] sm:$0xff]
        %v901 = vld [vmem:[%s367 + $0x80] sm:$0xff]
        %v902 = vld [vmem:[%s367 + $0x88] sm:$0xff]
        %v903 = vld [vmem:[%s367 + $0x90] sm:$0xff]
        %v904 = vld [vmem:[%s367 + $0x98] sm:$0xff]
        %v905 = vld [vmem:[%s367 + $0xa0] sm:$0xff]
        %v906 = vld [vmem:[%s367 + $0xa8] sm:$0xff]
        %v907 = vld [vmem:[%s367 + $0xb0] sm:$0xff]
        %v908 = vld [vmem:[%s367 + $0xb8] sm:$0xff]
        %v909 = vld [vmem:[%s367 + $0xc0] sm:$0xff]
        %v910 = vld [vmem:[%s367 + $0xc8] sm:$0xff]
        %v911 = vld [vmem:[%s367 + $0xd0] sm:$0xff]
        %v912 = vld [vmem:[%s367 + $0xd8] sm:$0xff]
        %v913 = vld [vmem:[%s367 + $0xe0] sm:$0xff]
        %v914 = vld [vmem:[%s367 + $0xe8] sm:$0xff]
        %v915 = vld [vmem:[%s367 + $0xf0] sm:$0xff]
        %v916 = vld [vmem:[%s367 + $0xf8] sm:$0xff]
        %v917 = vpack.c.bf16 %v681, %v678
        %v918 = vpack.c.bf16 %v687, %v684
        %v919 = vpack.c.bf16 %v693, %v690
        %v920 = vpack.c.bf16 %v699, %v696
        %v921 = vpack.c.bf16 %v705, %v702
        %v922 = vpack.c.bf16 %v711, %v708
        %v923 = vpack.c.bf16 %v717, %v714
        %v924 = vpack.c.bf16 %v723, %v720
        %v925 = vpack.c.bf16 %v729, %v726
        %v926 = vpack.c.bf16 %v735, %v732
        %v927 = vpack.c.bf16 %v741, %v738
        %v928 = vpack.c.bf16 %v747, %v744
        %v929 = vpack.c.bf16 %v753, %v750
        %v930 = vpack.c.bf16 %v759, %v756
        %v931 = vpack.c.bf16 %v765, %v762
        %v932 = vpack.c.bf16 %v771, %v768
        %v933 = vpack.c.bf16 %v777, %v774
        %v934 = vpack.c.bf16 %v783, %v780
        %v935 = vpack.c.bf16 %v789, %v786
        %v936 = vpack.c.bf16 %v795, %v792
        %v937 = vpack.c.bf16 %v801, %v798
        %v938 = vpack.c.bf16 %v807, %v804
        %v939 = vpack.c.bf16 %v813, %v810
        %v940 = vpack.c.bf16 %v819, %v816
        %v941 = vpack.c.bf16 %v825, %v822
        %v942 = vpack.c.bf16 %v831, %v828
        %v943 = vpack.c.bf16 %v837, %v834
        %v944 = vpack.c.bf16 %v843, %v840
        %v945 = vpack.c.bf16 %v849, %v846
        %v946 = vpack.c.bf16 %v855, %v852
        %v947 = vpack.c.bf16 %v861, %v858
        %v948 = vpack.c.bf16 %v867, %v864
        %v981 = vunpack.c.l.b16 %v885
        %v982 = vunpack.c.h.b16 %v885
        %v983 = vunpack.c.l.b16 %v886
        %v984 = vunpack.c.h.b16 %v886
        %v985 = vunpack.c.l.b16 %v887
        %v986 = vunpack.c.h.b16 %v887
        %v987 = vunpack.c.l.b16 %v888
        %v988 = vunpack.c.h.b16 %v888
        %v989 = vunpack.c.l.b16 %v889
        %v990 = vunpack.c.h.b16 %v889
        %v991 = vunpack.c.l.b16 %v890
        %v992 = vunpack.c.h.b16 %v890
        %v993 = vunpack.c.l.b16 %v891
        %v994 = vunpack.c.h.b16 %v891
        %v995 = vunpack.c.l.b16 %v892
        %v996 = vunpack.c.h.b16 %v892
        %v997 = vunpack.c.l.b16 %v893
        %v998 = vunpack.c.h.b16 %v893
        %v999 = vunpack.c.l.b16 %v894
        %v1000 = vunpack.c.h.b16 %v894
        %v1001 = vunpack.c.l.b16 %v895
        %v1002 = vunpack.c.h.b16 %v895
        %v1003 = vunpack.c.l.b16 %v896
        %v1004 = vunpack.c.h.b16 %v896
        %v1005 = vunpack.c.l.b16 %v897
        %v1006 = vunpack.c.h.b16 %v897
        %v1007 = vunpack.c.l.b16 %v898
        %v1008 = vunpack.c.h.b16 %v898
        %v1009 = vunpack.c.l.b16 %v899
        %v1010 = vunpack.c.h.b16 %v899
        %v1011 = vunpack.c.l.b16 %v900
        %v1012 = vunpack.c.h.b16 %v900
        %v1013 = vunpack.c.l.b16 %v901
        %v1014 = vunpack.c.h.b16 %v901
        %v1015 = vunpack.c.l.b16 %v902
        %v1016 = vunpack.c.h.b16 %v902
        %v1017 = vunpack.c.l.b16 %v903
        %v1018 = vunpack.c.h.b16 %v903
        %v1019 = vunpack.c.l.b16 %v904
        %v1020 = vunpack.c.h.b16 %v904
        %v1021 = vunpack.c.l.b16 %v905
        %v1022 = vunpack.c.h.b16 %v905
        %v1023 = vunpack.c.l.b16 %v906
        %v1024 = vunpack.c.h.b16 %v906
        %v1025 = vunpack.c.l.b16 %v907
        %v1026 = vunpack.c.h.b16 %v907
        %v1027 = vunpack.c.l.b16 %v908
        %v1028 = vunpack.c.h.b16 %v908
        %v1029 = vunpack.c.l.b16 %v909
        %v1030 = vunpack.c.h.b16 %v909
        %v1031 = vunpack.c.l.b16 %v910
        %v1032 = vunpack.c.h.b16 %v910
        %v1033 = vunpack.c.l.b16 %v911
        %v1034 = vunpack.c.h.b16 %v911
        %v1035 = vunpack.c.l.b16 %v912
        %v1036 = vunpack.c.h.b16 %v912
        %v1037 = vunpack.c.l.b16 %v913
        %v1038 = vunpack.c.h.b16 %v913
        %v1039 = vunpack.c.l.b16 %v914
        %v1040 = vunpack.c.h.b16 %v914
        %v1041 = vunpack.c.l.b16 %v915
        %v1042 = vunpack.c.h.b16 %v915
        %v1043 = vunpack.c.l.b16 %v916
        %v1044 = vunpack.c.h.b16 %v916
        %v1045 = vpack.c.b16 %v985, %v981
        %v1046 = vpack.c.b16 %v986, %v982
        %v1047 = vpack.c.b16 %v987, %v983
        %v1048 = vpack.c.b16 %v988, %v984
        %v1049 = vpack.c.b16 %v993, %v989
        %v1050 = vpack.c.b16 %v994, %v990
        %v1051 = vpack.c.b16 %v995, %v991
        %v1052 = vpack.c.b16 %v996, %v992
        %v1053 = vpack.c.b16 %v1001, %v997
        %v1054 = vpack.c.b16 %v1002, %v998
        %v1055 = vpack.c.b16 %v1003, %v999
        %v1056 = vpack.c.b16 %v1004, %v1000
        %v1057 = vpack.c.b16 %v1009, %v1005
        %v1058 = vpack.c.b16 %v1010, %v1006
        %v1059 = vpack.c.b16 %v1011, %v1007
        %v1060 = vpack.c.b16 %v1012, %v1008
        %v1061 = vpack.c.b16 %v1017, %v1013
        %v1062 = vpack.c.b16 %v1018, %v1014
        %v1063 = vpack.c.b16 %v1019, %v1015
        %v1064 = vpack.c.b16 %v1020, %v1016
        %v1065 = vpack.c.b16 %v1025, %v1021
        %v1066 = vpack.c.b16 %v1026, %v1022
        %v1067 = vpack.c.b16 %v1027, %v1023
        %v1068 = vpack.c.b16 %v1028, %v1024
        %v1069 = vpack.c.b16 %v1033, %v1029
        %v1070 = vpack.c.b16 %v1034, %v1030
        %v1071 = vpack.c.b16 %v1035, %v1031
        %v1072 = vpack.c.b16 %v1036, %v1032
        %v1073 = vpack.c.b16 %v1041, %v1037
        %v1074 = vpack.c.b16 %v1042, %v1038
        %v1075 = vpack.c.b16 %v1043, %v1039
        %v1076 = vpack.c.b16 %v1044, %v1040
        %1109 = vmatpush.bf16.msra.mxu0 %v924
        %1110 = vmatpush.bf16.msra.mxu0 %v923
        %1111 = vmatpush.bf16.msra.mxu0 %v922
        %1112 = vmatpush.bf16.msra.mxu0 %v921
        %1113 = vmatpush.bf16.msra.mxu0 %v920
        %1114 = vmatpush.bf16.msra.mxu0 %v919
        %1115 = vmatpush.bf16.msra.mxu0 %v918
        %1116 = vmatpush.bf16.msra.mxu0 %v917
        %1117 = vmatmul.bf16.gmra.mxu0 %v1045
        %v1118 = vpop.f32.mrf.mxu0
        %v1119 = vadd.f32 0.0, %v1118
        %v1120 = vpop.f32.mrf.mxu0
        %v1121 = vadd.f32 0.0, %v1120
        %1122 = vmatmul.bf16.gmra.mxu0 %v1049
        %v1123 = vpop.f32.mrf.mxu0
        %v1124 = vadd.f32 0.0, %v1123
        %v1125 = vpop.f32.mrf.mxu0
        %v1126 = vadd.f32 0.0, %v1125
        %1127 = vmatmul.bf16.gmra.mxu0 %v1053
        %v1128 = vpop.f32.mrf.mxu0
        %v1129 = vadd.f32 0.0, %v1128
        %v1130 = vpop.f32.mrf.mxu0
        %v1131 = vadd.f32 0.0, %v1130
        %1132 = vmatmul.bf16.gmra.mxu0 %v1057
        %v1133 = vpop.f32.mrf.mxu0
        %v1134 = vadd.f32 0.0, %v1133
        %v1135 = vpop.f32.mrf.mxu0
        %v1136 = vadd.f32 0.0, %v1135
        %1137 = vmatmul.bf16.gmra.mxu0 %v1061
        %v1138 = vpop.f32.mrf.mxu0
        %v1139 = vadd.f32 0.0, %v1138
        %v1140 = vpop.f32.mrf.mxu0
        %v1141 = vadd.f32 0.0, %v1140
        %1142 = vmatmul.bf16.gmra.mxu0 %v1065
        %v1143 = vpop.f32.mrf.mxu0
        %v1144 = vadd.f32 0.0, %v1143
        %v1145 = vpop.f32.mrf.mxu0
        %v1146 = vadd.f32 0.0, %v1145
        %1147 = vmatmul.bf16.gmra.mxu0 %v1069
        %v1148 = vpop.f32.mrf.mxu0
        %v1149 = vadd.f32 0.0, %v1148
        %v1150 = vpop.f32.mrf.mxu0
        %v1151 = vadd.f32 0.0, %v1150
        %1152 = vmatmul.bf16.gmra.mxu0 %v1073
        %v1153 = vpop.f32.mrf.mxu0
        %v1154 = vadd.f32 0.0, %v1153
        %v1155 = vpop.f32.mrf.mxu0
        %v1156 = vadd.f32 0.0, %v1155
        %1157 = vdwg.mxu0
        %1158 = vmatpush.bf16.msra.mxu0 %v932
        %1159 = vmatpush.bf16.msra.mxu0 %v931
        %1160 = vmatpush.bf16.msra.mxu0 %v930
        %1161 = vmatpush.bf16.msra.mxu0 %v929
        %1162 = vmatpush.bf16.msra.mxu0 %v928
        %1163 = vmatpush.bf16.msra.mxu0 %v927
        %1164 = vmatpush.bf16.msra.mxu0 %v926
        %1165 = vmatpush.bf16.msra.mxu0 %v925
        %1166 = vmatmul.bf16.gmra.mxu0 %v1046
        %v1167 = vpop.f32.mrf.mxu0
        %v1168 = vadd.f32 %v1119, %v1167
        %v1169 = vpop.f32.mrf.mxu0
        %v1170 = vadd.f32 %v1121, %v1169
        %1171 = vmatmul.bf16.gmra.mxu0 %v1050
        %v1172 = vpop.f32.mrf.mxu0
        %v1173 = vadd.f32 %v1124, %v1172
        %v1174 = vpop.f32.mrf.mxu0
        %v1175 = vadd.f32 %v1126, %v1174
        %1176 = vmatmul.bf16.gmra.mxu0 %v1054
        %v1177 = vpop.f32.mrf.mxu0
        %v1178 = vadd.f32 %v1129, %v1177
        %v1179 = vpop.f32.mrf.mxu0
        %v1180 = vadd.f32 %v1131, %v1179
        %1181 = vmatmul.bf16.gmra.mxu0 %v1058
        %v1182 = vpop.f32.mrf.mxu0
        %v1183 = vadd.f32 %v1134, %v1182
        %v1184 = vpop.f32.mrf.mxu0
        %v1185 = vadd.f32 %v1136, %v1184
        %1186 = vmatmul.bf16.gmra.mxu0 %v1062
        %v1187 = vpop.f32.mrf.mxu0
        %v1188 = vadd.f32 %v1139, %v1187
        %v1189 = vpop.f32.mrf.mxu0
        %v1190 = vadd.f32 %v1141, %v1189
        %1191 = vmatmul.bf16.gmra.mxu0 %v1066
        %v1192 = vpop.f32.mrf.mxu0
        %v1193 = vadd.f32 %v1144, %v1192
        %v1194 = vpop.f32.mrf.mxu0
        %v1195 = vadd.f32 %v1146, %v1194
        %1196 = vmatmul.bf16.gmra.mxu0 %v1070
        %v1197 = vpop.f32.mrf.mxu0
        %v1198 = vadd.f32 %v1149, %v1197
        %v1199 = vpop.f32.mrf.mxu0
        %v1200 = vadd.f32 %v1151, %v1199
        %1201 = vmatmul.bf16.gmra.mxu0 %v1074
        %v1202 = vpop.f32.mrf.mxu0
        %v1203 = vadd.f32 %v1154, %v1202
        %v1204 = vpop.f32.mrf.mxu0
        %v1205 = vadd.f32 %v1156, %v1204
        %1206 = vdwg.mxu0
        %1207 = vmatpush.bf16.msra.mxu0 %v940
        %1208 = vmatpush.bf16.msra.mxu0 %v939
        %1209 = vmatpush.bf16.msra.mxu0 %v938
        %1210 = vmatpush.bf16.msra.mxu0 %v937
        %1211 = vmatpush.bf16.msra.mxu0 %v936
        %1212 = vmatpush.bf16.msra.mxu0 %v935
        %1213 = vmatpush.bf16.msra.mxu0 %v934
        %1214 = vmatpush.bf16.msra.mxu0 %v933
        %1215 = vmatmul.bf16.gmra.mxu0 %v1047
        %v1216 = vpop.f32.mrf.mxu0
        %v1217 = vadd.f32 %v1168, %v1216
        %v1218 = vpop.f32.mrf.mxu0
        %v1219 = vadd.f32 %v1170, %v1218
        %1220 = vmatmul.bf16.gmra.mxu0 %v1051
        %v1221 = vpop.f32.mrf.mxu0
        %v1222 = vadd.f32 %v1173, %v1221
        %v1223 = vpop.f32.mrf.mxu0
        %v1224 = vadd.f32 %v1175, %v1223
        %1225 = vmatmul.bf16.gmra.mxu0 %v1055
        %v1226 = vpop.f32.mrf.mxu0
        %v1227 = vadd.f32 %v1178, %v1226
        %v1228 = vpop.f32.mrf.mxu0
        %v1229 = vadd.f32 %v1180, %v1228
        %1230 = vmatmul.bf16.gmra.mxu0 %v1059
        %v1231 = vpop.f32.mrf.mxu0
        %v1232 = vadd.f32 %v1183, %v1231
        %v1233 = vpop.f32.mrf.mxu0
        %v1234 = vadd.f32 %v1185, %v1233
        %1235 = vmatmul.bf16.gmra.mxu0 %v1063
        %v1236 = vpop.f32.mrf.mxu0
        %v1237 = vadd.f32 %v1188, %v1236
        %v1238 = vpop.f32.mrf.mxu0
        %v1239 = vadd.f32 %v1190, %v1238
        %1240 = vmatmul.bf16.gmra.mxu0 %v1067
        %v1241 = vpop.f32.mrf.mxu0
        %v1242 = vadd.f32 %v1193, %v1241
        %v1243 = vpop.f32.mrf.mxu0
        %v1244 = vadd.f32 %v1195, %v1243
        %1245 = vmatmul.bf16.gmra.mxu0 %v1071
        %v1246 = vpop.f32.mrf.mxu0
        %v1247 = vadd.f32 %v1198, %v1246
        %v1248 = vpop.f32.mrf.mxu0
        %v1249 = vadd.f32 %v1200, %v1248
        %1250 = vmatmul.bf16.gmra.mxu0 %v1075
        %v1251 = vpop.f32.mrf.mxu0
        %v1252 = vadd.f32 %v1203, %v1251
        %v1253 = vpop.f32.mrf.mxu0
        %v1254 = vadd.f32 %v1205, %v1253
        %1255 = vdwg.mxu0
        %1256 = vmatpush.bf16.msra.mxu0 %v948
        %1257 = vmatpush.bf16.msra.mxu0 %v947
        %1258 = vmatpush.bf16.msra.mxu0 %v946
        %1259 = vmatpush.bf16.msra.mxu0 %v945
        %1260 = vmatpush.bf16.msra.mxu0 %v944
        %1261 = vmatpush.bf16.msra.mxu0 %v943
        %1262 = vmatpush.bf16.msra.mxu0 %v942
        %1263 = vmatpush.bf16.msra.mxu0 %v941
        %1264 = vmatmul.bf16.gmra.mxu0 %v1048
        %v1265 = vpop.f32.mrf.mxu0
        %v1266 = vadd.f32 %v1217, %v1265
        %v1267 = vpop.f32.mrf.mxu0
        %v1268 = vadd.f32 %v1219, %v1267
        %1269 = vmatmul.bf16.gmra.mxu0 %v1052
        %v1270 = vpop.f32.mrf.mxu0
        %v1271 = vadd.f32 %v1222, %v1270
        %v1272 = vpop.f32.mrf.mxu0
        %v1273 = vadd.f32 %v1224, %v1272
        %1274 = vmatmul.bf16.gmra.mxu0 %v1056
        %v1275 = vpop.f32.mrf.mxu0
        %v1276 = vadd.f32 %v1227, %v1275
        %v1277 = vpop.f32.mrf.mxu0
        %v1278 = vadd.f32 %v1229, %v1277
        %1279 = vmatmul.bf16.gmra.mxu0 %v1060
        %v1280 = vpop.f32.mrf.mxu0
        %v1281 = vadd.f32 %v1232, %v1280
        %v1282 = vpop.f32.mrf.mxu0
        %v1283 = vadd.f32 %v1234, %v1282
        %1284 = vmatmul.bf16.gmra.mxu0 %v1064
        %v1285 = vpop.f32.mrf.mxu0
        %v1286 = vadd.f32 %v1237, %v1285
        %v1287 = vpop.f32.mrf.mxu0
        %v1288 = vadd.f32 %v1239, %v1287
        %1289 = vmatmul.bf16.gmra.mxu0 %v1068
        %v1290 = vpop.f32.mrf.mxu0
        %v1291 = vadd.f32 %v1242, %v1290
        %v1292 = vpop.f32.mrf.mxu0
        %v1293 = vadd.f32 %v1244, %v1292
        %1294 = vmatmul.bf16.gmra.mxu0 %v1072
        %v1295 = vpop.f32.mrf.mxu0
        %v1296 = vadd.f32 %v1247, %v1295
        %v1297 = vpop.f32.mrf.mxu0
        %v1298 = vadd.f32 %v1249, %v1297
        %1299 = vmatmul.bf16.gmra.mxu0 %v1076
        %v1300 = vpop.f32.mrf.mxu0
        %v1301 = vadd.f32 %v1252, %v1300
        %v1302 = vpop.f32.mrf.mxu0
        %v1303 = vadd.f32 %v1254, %v1302
        %1304 = vdwg.mxu0
        %v1305 = vadd.f32 %v869, %v1266
        %v1306 = vadd.f32 %v870, %v1268
        %v1307 = vadd.f32 %v871, %v1271
        %v1308 = vadd.f32 %v872, %v1273
        %v1309 = vadd.f32 %v873, %v1276
        %v1310 = vadd.f32 %v874, %v1278
        %v1311 = vadd.f32 %v875, %v1281
        %v1312 = vadd.f32 %v876, %v1283
        %v1313 = vadd.f32 %v877, %v1286
        %v1314 = vadd.f32 %v878, %v1288
        %v1315 = vadd.f32 %v879, %v1291
        %v1316 = vadd.f32 %v880, %v1293
        %v1317 = vadd.f32 %v881, %v1296
        %v1318 = vadd.f32 %v882, %v1298
        %v1319 = vadd.f32 %v883, %v1301
        %v1320 = vadd.f32 %v884, %v1303
        %1321 = vst [vmem:[#allocation2] sm:$0xff] %v1305
        %1322 = vst [vmem:[#allocation2 + $0x8] sm:$0xff] %v1306
        %1323 = vst [vmem:[#allocation2 + $0x10] sm:$0xff] %v1307
        %1324 = vst [vmem:[#allocation2 + $0x18] sm:$0xff] %v1308
        %1325 = vst [vmem:[#allocation2 + $0x20] sm:$0xff] %v1309
        %1326 = vst [vmem:[#allocation2 + $0x28] sm:$0xff] %v1310
        %1327 = vst [vmem:[#allocation2 + $0x30] sm:$0xff] %v1311
        %1328 = vst [vmem:[#allocation2 + $0x38] sm:$0xff] %v1312
        %1329 = vst [vmem:[#allocation2 + $0x40] sm:$0xff] %v1313
        %1330 = vst [vmem:[#allocation2 + $0x48] sm:$0xff] %v1314
        %1331 = vst [vmem:[#allocation2 + $0x50] sm:$0xff] %v1315
        %1332 = vst [vmem:[#allocation2 + $0x58] sm:$0xff] %v1316
        %1333 = vst [vmem:[#allocation2 + $0x60] sm:$0xff] %v1317
        %1334 = vst [vmem:[#allocation2 + $0x68] sm:$0xff] %v1318
        %1335 = vst [vmem:[#allocation2 + $0x70] sm:$0xff] %v1319
        %1336 = vst [vmem:[#allocation2 + $0x78] sm:$0xff] %v1320
        // Predicated region
        $region53: #{tpu_custom_call.1} parent=47 // pred_check
          %p1337 = pneg %p377
        $region54: #{tpu_custom_call.1} parent=47 // pred_check_branch
          %1339 = sbr.rel (%p1337) target = $region56
        $region55: #{tpu_custom_call.1} parent=47 // pred_region
          %v1340 = vld [vmem:[#allocation2] sm:$0xff]
          %v1341 = vld [vmem:[#allocation2 + $0x8] sm:$0xff]
          %v1342 = vld [vmem:[#allocation2 + $0x10] sm:$0xff]
          %v1343 = vld [vmem:[#allocation2 + $0x18] sm:$0xff]
          %v1344 = vld [vmem:[#allocation2 + $0x20] sm:$0xff]
          %v1345 = vld [vmem:[#allocation2 + $0x28] sm:$0xff]
          %v1346 = vld [vmem:[#allocation2 + $0x30] sm:$0xff]
          %v1347 = vld [vmem:[#allocation2 + $0x38] sm:$0xff]
          %v1348 = vld [vmem:[#allocation2 + $0x40] sm:$0xff]
          %v1349 = vld [vmem:[#allocation2 + $0x48] sm:$0xff]
          %v1350 = vld [vmem:[#allocation2 + $0x50] sm:$0xff]
          %v1351 = vld [vmem:[#allocation2 + $0x58] sm:$0xff]
          %v1352 = vld [vmem:[#allocation2 + $0x60] sm:$0xff]
          %v1353 = vld [vmem:[#allocation2 + $0x68] sm:$0xff]
          %v1354 = vld [vmem:[#allocation2 + $0x70] sm:$0xff]
          %v1355 = vld [vmem:[#allocation2 + $0x78] sm:$0xff]
          %v1356 = vld [vmem:[%s374] sm:$0xff]
          %v1357 = vld [vmem:[%s374 + $0x8] sm:$0xff]
          %v1358 = vld [vmem:[%s374 + $0x10] sm:$0xff]
          %v1359 = vld [vmem:[%s374 + $0x18] sm:$0xff]
          %v1360 = vld [vmem:[%s374 + $0x20] sm:$0xff]
          %v1361 = vld [vmem:[%s374 + $0x28] sm:$0xff]
          %v1362 = vld [vmem:[%s374 + $0x30] sm:$0xff]
          %v1363 = vld [vmem:[%s374 + $0x38] sm:$0xff]
          %v1364 = vld [vmem:[%s374 + $0x40] sm:$0xff]
          %v1365 = vld [vmem:[%s374 + $0x48] sm:$0xff]
          %v1366 = vld [vmem:[%s374 + $0x50] sm:$0xff]
          %v1367 = vld [vmem:[%s374 + $0x58] sm:$0xff]
          %v1368 = vld [vmem:[%s374 + $0x60] sm:$0xff]
          %v1369 = vld [vmem:[%s374 + $0x68] sm:$0xff]
          %v1370 = vld [vmem:[%s374 + $0x70] sm:$0xff]
          %v1371 = vld [vmem:[%s374 + $0x78] sm:$0xff]
          %1373 = vset.pattern.permute.xlu0 0
          %1374 = vperm.xlu0 %1373, %v1356
          %v1375 = vpop.permute.xlu0 %1374
          %1378 = vset.pattern.permute.xlu0 0
          %1379 = vperm.xlu0 %1378, %v1357
          %v1380 = vpop.permute.xlu0 %1379
          %1383 = vset.pattern.permute.xlu0 0
          %1384 = vperm.xlu0 %1383, %v1358
          %v1385 = vpop.permute.xlu0 %1384
          %1388 = vset.pattern.permute.xlu0 0
          %1389 = vperm.xlu0 %1388, %v1359
          %v1390 = vpop.permute.xlu0 %1389
          %1393 = vset.pattern.permute.xlu0 0
          %1394 = vperm.xlu0 %1393, %v1360
          %v1395 = vpop.permute.xlu0 %1394
          %1398 = vset.pattern.permute.xlu0 0
          %1399 = vperm.xlu0 %1398, %v1361
          %v1400 = vpop.permute.xlu0 %1399
          %1403 = vset.pattern.permute.xlu0 0
          %1404 = vperm.xlu0 %1403, %v1362
          %v1405 = vpop.permute.xlu0 %1404
          %1408 = vset.pattern.permute.xlu0 0
          %1409 = vperm.xlu0 %1408, %v1363
          %v1410 = vpop.permute.xlu0 %1409
          %1413 = vset.pattern.permute.xlu0 0
          %1414 = vperm.xlu0 %1413, %v1364
          %v1415 = vpop.permute.xlu0 %1414
          %1418 = vset.pattern.permute.xlu0 0
          %1419 = vperm.xlu0 %1418, %v1365
          %v1420 = vpop.permute.xlu0 %1419
          %1423 = vset.pattern.permute.xlu0 0
          %1424 = vperm.xlu0 %1423, %v1366
          %v1425 = vpop.permute.xlu0 %1424
          %1428 = vset.pattern.permute.xlu0 0
          %1429 = vperm.xlu0 %1428, %v1367
          %v1430 = vpop.permute.xlu0 %1429
          %1433 = vset.pattern.permute.xlu0 0
          %1434 = vperm.xlu0 %1433, %v1368
          %v1435 = vpop.permute.xlu0 %1434
          %1438 = vset.pattern.permute.xlu0 0
          %1439 = vperm.xlu0 %1438, %v1369
          %v1440 = vpop.permute.xlu0 %1439
          %1443 = vset.pattern.permute.xlu0 0
          %1444 = vperm.xlu0 %1443, %v1370
          %v1445 = vpop.permute.xlu0 %1444
          %1448 = vset.pattern.permute.xlu0 0
          %1449 = vperm.xlu0 %1448, %v1371
          %v1450 = vpop.permute.xlu0 %1449
          %v1452 = vmul.f32 %v1340, %v1375
          %v1453 = vmul.f32 %v1341, %v1380
          %v1454 = vmul.f32 %v1342, %v1385
          %v1455 = vmul.f32 %v1343, %v1390
          %v1456 = vmul.f32 %v1344, %v1395
          %v1457 = vmul.f32 %v1345, %v1400
          %v1458 = vmul.f32 %v1346, %v1405
          %v1459 = vmul.f32 %v1347, %v1410
          %v1460 = vmul.f32 %v1348, %v1415
          %v1461 = vmul.f32 %v1349, %v1420
          %v1462 = vmul.f32 %v1350, %v1425
          %v1463 = vmul.f32 %v1351, %v1430
          %v1464 = vmul.f32 %v1352, %v1435
          %v1465 = vmul.f32 %v1353, %v1440
          %v1466 = vmul.f32 %v1354, %v1445
          %v1467 = vmul.f32 %v1355, %v1450
          %v1468 = vld [vmem:[%s356] sm:$0xff]
          %v1469 = vld [vmem:[%s356 + $0x8] sm:$0xff]
          %v1470 = vld [vmem:[%s356 + $0x10] sm:$0xff]
          %v1471 = vld [vmem:[%s356 + $0x18] sm:$0xff]
          %v1472 = vld [vmem:[%s356 + $0x20] sm:$0xff]
          %v1473 = vld [vmem:[%s356 + $0x28] sm:$0xff]
          %v1474 = vld [vmem:[%s356 + $0x30] sm:$0xff]
          %v1475 = vld [vmem:[%s356 + $0x38] sm:$0xff]
          %v1476 = vld [vmem:[%s356 + $0x40] sm:$0xff]
          %v1477 = vld [vmem:[%s356 + $0x48] sm:$0xff]
          %v1478 = vld [vmem:[%s356 + $0x50] sm:$0xff]
          %v1479 = vld [vmem:[%s356 + $0x58] sm:$0xff]
          %v1480 = vld [vmem:[%s356 + $0x60] sm:$0xff]
          %v1481 = vld [vmem:[%s356 + $0x68] sm:$0xff]
          %v1482 = vld [vmem:[%s356 + $0x70] sm:$0xff]
          %v1483 = vld [vmem:[%s356 + $0x78] sm:$0xff]
          %v1484 = vld [vmem:[%s5] sm:$0xf]
          %vm1485 = vcmask 31744
          %v1487 = vsel %vm1485, %v1468, 0
          %v1490 = vsel %vm1485, %v1469, 0
          %v1493 = vsel %vm1485, %v1470, 0
          %v1496 = vsel %vm1485, %v1471, 0
          %v1499 = vsel %vm1485, %v1472, 0
          %v1502 = vsel %vm1485, %v1473, 0
          %v1505 = vsel %vm1485, %v1474, 0
          %v1508 = vsel %vm1485, %v1475, 0
          %v1511 = vsel %vm1485, %v1476, 0
          %v1514 = vsel %vm1485, %v1477, 0
          %v1517 = vsel %vm1485, %v1478, 0
          %v1520 = vsel %vm1485, %v1479, 0
          %v1523 = vsel %vm1485, %v1480, 0
          %v1526 = vsel %vm1485, %v1481, 0
          %v1529 = vsel %vm1485, %v1482, 0
          %v1532 = vsel %vm1485, %v1483, 0
          %v1535 = vsel %vm656, %v1484, 0
          %1537 = vmatpush.msra.mxu0 0.0
          %1538 = vmatpush.msra.mxu0 0.0
          %1539 = vmatpush.msra.mxu0 0.0
          %1540 = vmatpush.msra.mxu0 0.0
          %1541 = vmatpush.msra.mxu0 0.0
          %1542 = vmatpush.msra.mxu0 0.0
          %1543 = vmatpush.msra.mxu0 0.0
          %1544 = vmatpush.msra.mxu0 0.0
          %1545 = vmatpush.msra.mxu0 0.0
          %1546 = vmatpush.msra.mxu0 0.0
          %1547 = vmatpush.msra.mxu0 0.0
          %1548 = vmatpush.msra.mxu0 0.0
          %1549 = vmatpush.msra.mxu0 0.0
          %1550 = vmatpush.msra.mxu0 0.0
          %1551 = vmatpush.msra.mxu0 0.0
          %1552 = vmatpush.msra.mxu0 %v1535
          %1553 = vmatmul.f32.gmra.mxu0 %v1487
          %v1554 = vpop.f32.mrf.mxu0
          %v1555 = vadd.f32 0.0, %v1554
          %1556 = vmatmul.f32.gmra.mxu0 %v1490
          %v1557 = vpop.f32.mrf.mxu0
          %v1558 = vadd.f32 0.0, %v1557
          %1559 = vmatmul.f32.gmra.mxu0 %v1493
          %v1560 = vpop.f32.mrf.mxu0
          %v1561 = vadd.f32 0.0, %v1560
          %1562 = vmatmul.f32.gmra.mxu0 %v1496
          %v1563 = vpop.f32.mrf.mxu0
          %v1564 = vadd.f32 0.0, %v1563
          %1565 = vmatmul.f32.gmra.mxu0 %v1499
          %v1566 = vpop.f32.mrf.mxu0
          %v1567 = vadd.f32 0.0, %v1566
          %1568 = vmatmul.f32.gmra.mxu0 %v1502
          %v1569 = vpop.f32.mrf.mxu0
          %v1570 = vadd.f32 0.0, %v1569
          %1571 = vmatmul.f32.gmra.mxu0 %v1505
          %v1572 = vpop.f32.mrf.mxu0
          %v1573 = vadd.f32 0.0, %v1572
          %1574 = vmatmul.f32.gmra.mxu0 %v1508
          %v1575 = vpop.f32.mrf.mxu0
          %v1576 = vadd.f32 0.0, %v1575
          %1577 = vmatmul.f32.gmra.mxu0 %v1511
          %v1578 = vpop.f32.mrf.mxu0
          %v1579 = vadd.f32 0.0, %v1578
          %1580 = vmatmul.f32.gmra.mxu0 %v1514
          %v1581 = vpop.f32.mrf.mxu0
          %v1582 = vadd.f32 0.0, %v1581
          %1583 = vmatmul.f32.gmra.mxu0 %v1517
          %v1584 = vpop.f32.mrf.mxu0
          %v1585 = vadd.f32 0.0, %v1584
          %1586 = vmatmul.f32.gmra.mxu0 %v1520
          %v1587 = vpop.f32.mrf.mxu0
          %v1588 = vadd.f32 0.0, %v1587
          %1589 = vmatmul.f32.gmra.mxu0 %v1523
          %v1590 = vpop.f32.mrf.mxu0
          %v1591 = vadd.f32 0.0, %v1590
          %1592 = vmatmul.f32.gmra.mxu0 %v1526
          %v1593 = vpop.f32.mrf.mxu0
          %v1594 = vadd.f32 0.0, %v1593
          %1595 = vmatmul.f32.gmra.mxu0 %v1529
          %v1596 = vpop.f32.mrf.mxu0
          %v1597 = vadd.f32 0.0, %v1596
          %1598 = vmatmul.f32.gmra.mxu0 %v1532
          %v1599 = vpop.f32.mrf.mxu0
          %v1600 = vadd.f32 0.0, %v1599
          %1601 = vdwg.mxu0
          %v1602 = vadd.f32 %v1452, %v1555
          %v1603 = vadd.f32 %v1453, %v1558
          %v1604 = vadd.f32 %v1454, %v1561
          %v1605 = vadd.f32 %v1455, %v1564
          %v1606 = vadd.f32 %v1456, %v1567
          %v1607 = vadd.f32 %v1457, %v1570
          %v1608 = vadd.f32 %v1458, %v1573
          %v1609 = vadd.f32 %v1459, %v1576
          %v1610 = vadd.f32 %v1460, %v1579
          %v1611 = vadd.f32 %v1461, %v1582
          %v1612 = vadd.f32 %v1462, %v1585
          %v1613 = vadd.f32 %v1463, %v1588
          %v1614 = vadd.f32 %v1464, %v1591
          %v1615 = vadd.f32 %v1465, %v1594
          %v1616 = vadd.f32 %v1466, %v1597
          %v1617 = vadd.f32 %v1467, %v1600
          %v1618 = vld [vmem:[%s6] sm:$0x1]
          %v1620 = vperm.slane %v1618, 0
          %v1622 = vadd.f32 %v1602, %v1620
          %v1623 = vadd.f32 %v1603, %v1620
          %v1624 = vadd.f32 %v1604, %v1620
          %v1625 = vadd.f32 %v1605, %v1620
          %v1626 = vadd.f32 %v1606, %v1620
          %v1627 = vadd.f32 %v1607, %v1620
          %v1628 = vadd.f32 %v1608, %v1620
          %v1629 = vadd.f32 %v1609, %v1620
          %v1630 = vadd.f32 %v1610, %v1620
          %v1631 = vadd.f32 %v1611, %v1620
          %v1632 = vadd.f32 %v1612, %v1620
          %v1633 = vadd.f32 %v1613, %v1620
          %v1634 = vadd.f32 %v1614, %v1620
          %v1635 = vadd.f32 %v1615, %v1620
          %v1636 = vadd.f32 %v1616, %v1620
          %v1637 = vadd.f32 %v1617, %v1620
          %v1638 = vmax.f32 %v1622, 0.0
          %v1639 = vmax.f32 %v1623, 0.0
          %v1640 = vmax.f32 %v1624, 0.0
          %v1641 = vmax.f32 %v1625, 0.0
          %v1642 = vmax.f32 %v1626, 0.0
          %v1643 = vmax.f32 %v1627, 0.0
          %v1644 = vmax.f32 %v1628, 0.0
          %v1645 = vmax.f32 %v1629, 0.0
          %v1646 = vmax.f32 %v1630, 0.0
          %v1647 = vmax.f32 %v1631, 0.0
          %v1648 = vmax.f32 %v1632, 0.0
          %v1649 = vmax.f32 %v1633, 0.0
          %v1650 = vmax.f32 %v1634, 0.0
          %v1651 = vmax.f32 %v1635, 0.0
          %v1652 = vmax.f32 %v1636, 0.0
          %v1653 = vmax.f32 %v1637, 0.0
          %1654 = vst [vmem:[%s345] sm:$0xff] %v1638
          %1655 = vst [vmem:[%s345 + $0x8] sm:$0xff] %v1639
          %1656 = vst [vmem:[%s345 + $0x10] sm:$0xff] %v1640
          %1657 = vst [vmem:[%s345 + $0x18] sm:$0xff] %v1641
          %1658 = vst [vmem:[%s345 + $0x20] sm:$0xff] %v1642
          %1659 = vst [vmem:[%s345 + $0x28] sm:$0xff] %v1643
          %1660 = vst [vmem:[%s345 + $0x30] sm:$0xff] %v1644
          %1661 = vst [vmem:[%s345 + $0x38] sm:$0xff] %v1645
          %1662 = vst [vmem:[%s345 + $0x40] sm:$0xff] %v1646
          %1663 = vst [vmem:[%s345 + $0x48] sm:$0xff] %v1647
          %1664 = vst [vmem:[%s345 + $0x50] sm:$0xff] %v1648
          %1665 = vst [vmem:[%s345 + $0x58] sm:$0xff] %v1649
          %1666 = vst [vmem:[%s345 + $0x60] sm:$0xff] %v1650
          %1667 = vst [vmem:[%s345 + $0x68] sm:$0xff] %v1651
          %1668 = vst [vmem:[%s345 + $0x70] sm:$0xff] %v1652
          %1669 = vst [vmem:[%s345 + $0x78] sm:$0xff] %v1653
        $region56: #{tpu_custom_call.1} parent=47 // pred_fallthru
          _
        %s1670 = sand.u32 %s210, 1
        %s1671 = scalar_lea.sflag [#allocation4], %s1670
        %s1672 = sand.u32 %s210, 1
        %s1673 = smul.addr %s1672, 128
        %s1674 = scalar_lea.vmem [#allocation3], %s1673
        // Predicated region
        $region57: #{tpu_custom_call.1} parent=47 // pred_check
          %p1675 = pneg %p220
        $region58: #{tpu_custom_call.1} parent=47 // pred_check_branch
          %1677 = sbr.rel (%p1675) target = $region60
        $region59: #{tpu_custom_call.1} parent=47 // pred_region
          %s1678 = smul.u32 16, %s25
          %1680 = vsyncadd %s1671, 0
          %s1681 = smul.addr %s1678, 8
          %s1682 = scalar_lea.hbm %s7, %s1681
          %s1683 = sshll.u32 %s1674, 4
          %s1684 = int_to_ptr.vmem [resolvable:$true] %s1683
          %s1685 = sshll.u32 %s1682, 4
          %s1686 = int_to_ptr.hbm [resolvable:$true] %s1685
          %1691 = dma.vmem_to_hbm [thread:$0]  %s1684, 2048, %s1686, %s1671, 128, 128, 8
        $region60: #{tpu_custom_call.1} parent=47 // pred_fallthru
          _
      $region48: #{tpu_custom_call.1} parent=5 // pred_fallthru
        _
      %p1692 = scmp.le.s32.totalorder 2, %s16
      // Predicated region
      $region61: #{tpu_custom_call.1} parent=5 // pred_check
        %p1693 = pneg %p1692
      $region62: #{tpu_custom_call.1} parent=5 // pred_check_branch
        %1695 = sbr.rel (%p1693) target = $region64
      $region63: #{tpu_custom_call.1} parent=5 // pred_region
        %s1696 = ssub.s32 %s16, 2
        // Predicated region
        $region65: #{tpu_custom_call.1} parent=63 // pred_check
          %p1697 = pneg %p226
        $region66: #{tpu_custom_call.1} parent=63 // pred_check_branch
          %1699 = sbr.rel (%p1697) target = $region68
        $region67: #{tpu_custom_call.1} parent=63 // pred_region
          %s1700 = sand.u32 %s211, 1
          %s1701 = scalar_lea.sflag [#allocation4], %s1700
          %s1702 = sand.u32 %s211, 1
          %s1703 = smul.addr %s1702, 128
          %s1704 = scalar_lea.vmem [#allocation3], %s1703
          %1706 = dma.done %s1701, 2048
        $region68: #{tpu_custom_call.1} parent=63 // pred_fallthru
          _
      $region64: #{tpu_custom_call.1} parent=5 // pred_fallthru
        _
    $region6: #{tpu_custom_call.1} parent=1 // loop_footer
      %s20 = sadd.s32 1, %s16
    $region7: #{tpu_custom_call.1} parent=1 // loop_footer_branch
      %15 = sbr.rel target = $region3
    $region8: #{tpu_custom_call.1} parent=1 // loop_exit
      _
    %1707 = vsyncpa [#allocation4], 1
    %s1708 = scalar_lea.sflag [#allocation4], 1
    %1709 = vsyncpa %s1708, 1

</llo_original>
